<compile_context>
chip_gen: v7x
topology: tpu7x:2x2x1
jax: 0.10.0
libtpu: 0.0.40
codegen_flags: <defaults>
</compile_context>

<pallas_src>
import math
from functools import partial

import jax
import jax.numpy as jnp
from jax.experimental import pallas as pl
from jax.experimental.pallas import tpu as pltpu


def _link_predictor_kernel(num_hidden, *refs):
    # refs = (x_i, x_j, pos_i, pos_j, [W, b] * num_hidden, w_fold, w_pos, b_fold, out)
    xi_ref, xj_ref, pi_ref, pj_ref = refs[0:4]
    lin_refs = refs[4:4 + 2 * num_hidden]
    wfold_ref = refs[4 + 2 * num_hidden]     # [H_last, 1] f32 VMEM (= W_last[:, :1] * w_out[0])
    wpos_ref = refs[5 + 2 * num_hidden]      # [P, 1]      f32 VMEM (= w_out[1] broadcast)
    bias_ref = refs[6 + 2 * num_hidden]      # (1,)        f32 SMEM (= b_last*w_out[0] + b_out)
    o_ref = refs[-1]                         # [TILE_N, 1] f32

    # x = x_i * x_j, multiplied in f32 (only the MXU operand is cast back to the
    # weight dtype on the bf16 path, avoiding an extra rounding of the product).
    x = xi_ref[...].astype(jnp.float32) * xj_ref[...].astype(jnp.float32)

    # pos_encode = ((pos_i - pos_j) ** 2).sum(-1, keepdim=True), accumulated in f32.
    # Folded with w_out[1] via an MXU dot against a [P, 1] column so the cross-lane
    # reduction stays off the XLU/VALU slots (MXU is essentially idle here).
    d = pi_ref[...].astype(jnp.float32) - pj_ref[...].astype(jnp.float32)
    pos_term = jnp.dot(d * d, wpos_ref[...],
                       preferred_element_type=jnp.float32)            # [TILE_N, 1]

    # Hidden layers: Linear -> ReLU -> Dropout(eval = identity)
    for l in range(num_hidden):
        w_ref = lin_refs[2 * l]
        b_ref = lin_refs[2 * l + 1]
        x = jnp.dot(x.astype(w_ref.dtype), w_ref[...],
                    preferred_element_type=jnp.float32) + b_ref[...]
        x = jnp.maximum(x, 0.0)
        # TODO(synk): F.dropout is identity in eval mode; training-mode dropout not implemented.

    # Folded head: last Linear(H, 1) fused with output Linear(2, 1):
    #   logit = x @ (W_last[:, :1] * w_out[0]) + pos_encode * w_out[1]
    #           + (b_last * w_out[0] + b_out)
    logit = jnp.dot(x, wfold_ref[...], preferred_element_type=jnp.float32)
    logit = logit + pos_term + bias_ref[0]
    o_ref[...] = jax.nn.sigmoid(logit).astype(o_ref.dtype)


def _lane_pad(w):
    return ((w + 127) // 128) * 128


def _sublane_pad(n):
    return ((n + 7) // 8) * 8


def _choose_tile_n(n_rows, tile_n):
    """Row-tile sizing: large tiles amortize the ~0.35 us per-step overhead, but keep
    >= ~16 grid steps for large N so v7x's two TensorCores get balanced 'parallel'
    work (harmless on single-TC v5e/v6e)."""
    if tile_n >= n_rows:
        return n_rows                                  # single full-extent block
    cap = max(1024, (n_rows // 16) // 8 * 8)
    tile_n = max(8, (min(tile_n, cap) // 8) * 8)       # (8,128) sublane constraint
    return min(tile_n, n_rows)


def link_predictor_forward(x_i, x_j, pos_i, pos_j, lin_params, w_out, b_out,
                           *, tile_n=8192, compute_dtype=jnp.bfloat16,
                           vmem_limit_bytes=None):
    """Forward pass of LinkPredictor (eval mode).

    x_i, x_j   : [N, in_channels]
    pos_i/pos_j: [N, pos_dim]
    lin_params : list of (W [in, out], b [1, out]) for every nn.Linear in self.lins
                 (weights pre-transposed from PyTorch's [out, in]); last layer must
                 have out == 1 (required by the module's Linear(2, 1) output head).
    w_out, b_out: the output Linear(2, 1): w_out shape (2,), b_out shape (1,).
    compute_dtype: dtype for the x/pos HBM streams and hidden weights (bf16 halves
                 the traffic of this HBM-bound kernel); accumulation is always f32.
    """
    N, C = x_i.shape
    P = pos_i.shape[1]
    num_lins = len(lin_params)
    num_hidden = num_lins - 1
    assert num_hidden >= 1
    w_last, b_last = lin_params[-1]
    H_last = w_last.shape[0]
    assert w_last.shape[1] == 1, "output head Linear(2,1) requires out_channels == 1"

    # ---- Host-side constant folding of the head (exact: out_channels == 1) ----
    w_fold = (w_last[:, :1] * w_out[0]).astype(jnp.float32)            # [H_last, 1]
    w_pos = jnp.full((P, 1), w_out[1], jnp.float32)                    # [P, 1]
    b_fold = (b_last[0, 0] * w_out[0] + b_out[0]).reshape(1).astype(jnp.float32)  # (1,)

    # ---- Low-precision HBM streams (x AND pos); biases / accumulation stay f32 ----
    x_i = x_i.astype(compute_dtype)
    x_j = x_j.astype(compute_dtype)
    pos_i = pos_i.astype(compute_dtype)
    pos_j = pos_j.astype(compute_dtype)
    hidden_flat = []
    for (w, b) in lin_params[:-1]:
        hidden_flat += [w.astype(compute_dtype), b.astype(jnp.float32)]

    # ---- Row tiling: NO host-side padding; Pallas handles the ragged last block
    #      (padded reads, masked OOB writes; rows are independent so this is safe).
    tile_n = _choose_tile_n(N, tile_n)
    grid_n = pl.cdiv(N, tile_n)

    # ---- VMEM accounting with lane padding (last dims 32/8/1 pad to 128 lanes) ----
    itemsize_x = jnp.dtype(compute_dtype).itemsize
    tile_rows = _sublane_pad(tile_n)
    row_bytes = (2 * _lane_pad(C) * itemsize_x          # x_i, x_j blocks
                 + 2 * _lane_pad(P) * itemsize_x        # pos_i, pos_j blocks
                 + _lane_pad(1) * 4)                    # f32 output block
    est = 2 * tile_rows * row_bytes                     # double-buffered pipeline
    for (w, b) in lin_params[:-1]:                      # resident weights (tiny)
        est += 2 * (_sublane_pad(w.shape[0]) * _lane_pad(w.shape[1]) * itemsize_x
                    + 8 * _lane_pad(b.shape[1]) * 4)
    est += 2 * (_sublane_pad(H_last) * 128 * 4 + _sublane_pad(P) * 128 * 4)
    if vmem_limit_bytes is None:
        # Enough for the blocks plus margin; capped at 64 MiB (v7x physical ceiling,
        # well under v5e/v6e's 128 MiB).  Default tile_n=8192 fits in either dtype.
        vmem_limit_bytes = int(min(max(est + (4 << 20), 16 << 20), 64 << 20))

    # ---- BlockSpecs ----
    row_spec_x = pl.BlockSpec((tile_n, C), lambda i: (i, 0))
    row_spec_p = pl.BlockSpec((tile_n, P), lambda i: (i, 0))
    const_specs = []
    for (w, b) in lin_params[:-1]:
        din, dout = w.shape
        const_specs += [pl.BlockSpec((din, dout), lambda i: (0, 0)),
                        pl.BlockSpec((1, dout), lambda i: (0, 0))]
    wfold_spec = pl.BlockSpec((H_last, 1), lambda i: (0, 0))
    wpos_spec = pl.BlockSpec((P, 1), lambda i: (0, 0))
    smem_spec = pl.BlockSpec(memory_space=pltpu.MemorySpace.SMEM)
    out_spec = pl.BlockSpec((tile_n, 1), lambda i: (i, 0))

    in_specs = ([row_spec_x, row_spec_x, row_spec_p, row_spec_p]
                + const_specs + [wfold_spec, wpos_spec, smem_spec])

    # ---- Cost estimate (helps XLA schedule around the custom call) ----
    matmul_flops_row = sum(2 * w.shape[0] * w.shape[1] + 2 * w.shape[1]
                           for (w, _) in lin_params[:-1])
    flops_row = 2 * C + 5 * P + matmul_flops_row + 2 * H_last + 6
    bytes_accessed = int(
        N * (2 * C * itemsize_x + 2 * P * itemsize_x + 4)
        + sum(int(w.size) * itemsize_x + int(b.size) * 4 for (w, b) in lin_params[:-1])
        + (H_last + P + 1) * 4)
    cost = pl.CostEstimate(flops=int(N * flops_row),
                           transcendentals=int(N),
                           bytes_accessed=bytes_accessed)

    out = pl.pallas_call(
        partial(_link_predictor_kernel, num_hidden),
        out_shape=jax.ShapeDtypeStruct((N, 1), jnp.float32),
        grid=(grid_n,),
        in_specs=in_specs,
        out_specs=out_spec,
        compiler_params=pltpu.CompilerParams(
            dimension_semantics=("parallel",),
            vmem_limit_bytes=vmem_limit_bytes),
        cost_estimate=cost,
    )(x_i, x_j, pos_i, pos_j, *hidden_flat, w_fold, w_pos, b_fold)

    return out


def init_linear(key, fan_in, fan_out):
    """PyTorch nn.Linear default init: U(-1/sqrt(fan_in), 1/sqrt(fan_in))."""
    k_w, k_b = jax.random.split(key)
    bound = 1.0 / math.sqrt(fan_in)
    w = jax.random.uniform(k_w, (fan_in, fan_out), jnp.float32, -bound, bound)
    b = jax.random.uniform(k_b, (1, fan_out), jnp.float32, -bound, bound)
    return w, b


if __name__ == "__main__":
    # Module hyperparameters (small, consistent with the forward pass)
    in_channels = 32
    hidden_channels = 32
    out_channels = 1          # required: output head is Linear(2, 1) over cat([x, pos_encode])
    num_layers = 3
    pos_dim = 8
    N = 1000                  # not a multiple of tile_n -> exercises the ragged last block

    key = jax.random.PRNGKey(0)
    keys = jax.random.split(key, 16)

    # Inputs
    x_i = jax.random.normal(keys[0], (N, in_channels), jnp.float32)
    x_j = jax.random.normal(keys[1], (N, in_channels), jnp.float32)
    pos_i = jax.random.normal(keys[2], (N, pos_dim), jnp.float32)
    pos_j = jax.random.normal(keys[3], (N, pos_dim), jnp.float32)

    # Parameters: lins = [Linear(in,h)] + [Linear(h,h)]*(L-2) + [Linear(h,out)]
    lin_params = []
    dims = [in_channels] + [hidden_channels] * (num_layers - 1) + [out_channels]
    for i in range(num_layers):
        lin_params.append(init_linear(keys[4 + i], dims[i], dims[i + 1]))

    # output = Linear(2, 1)
    bound = 1.0 / math.sqrt(2.0)
    w_out = jax.random.uniform(keys[10], (2,), jnp.float32, -bound, bound)
    b_out = jax.random.uniform(keys[11], (1,), jnp.float32, -bound, bound)

    # Pure-JAX reference (eval-mode module semantics)
    x = x_i * x_j
    pos_encode = jnp.sum((pos_i - pos_j) ** 2, axis=-1, keepdims=True)
    for (w, b) in lin_params[:-1]:
        x = jnp.maximum(x @ w + b, 0.0)
    x = x @ lin_params[-1][0] + lin_params[-1][1]
    ref = jax.nn.sigmoid(jnp.concatenate([x, pos_encode], axis=1) @ w_out.reshape(2, 1) + b_out)

    # f32 path, multi-tile grid (3 full 256-row tiles + one ragged 232-row tile,
    # no host-side padding) -- tight numerical check.
    out = link_predictor_forward(x_i, x_j, pos_i, pos_j, lin_params, w_out, b_out,
                                 tile_n=256, compute_dtype=jnp.float32)
    jax.block_until_ready(out)
    assert out.shape == (N, 1)
    assert jnp.allclose(out, ref, atol=1e-4, rtol=1e-4)

    # bf16 production path (x AND pos streams in bf16, f32 accumulation) with the
    # large default tile (clamps to a single full-extent 1000-row block here).
    # Tolerance is loose only because the *inputs* are rounded to bf16.
    out_bf16 = link_predictor_forward(x_i, x_j, pos_i, pos_j, lin_params, w_out, b_out,
                                      compute_dtype=jnp.bfloat16)
    jax.block_until_ready(out_bf16)
    assert out_bf16.shape == (N, 1)
    assert jnp.allclose(out_bf16, ref, atol=1e-1)

    print("KERNEL_OK")
</pallas_src>

<mosaic_0001>
module attributes {stable_mosaic.version = 11 : i64} {
  func.func @_link_predictor_kernel(%arg0: i32, %arg1: memref<256x32xf32, #tpu.memory_space<vmem>>, %arg2: memref<256x32xf32, #tpu.memory_space<vmem>>, %arg3: memref<256x8xf32, #tpu.memory_space<vmem>>, %arg4: memref<256x8xf32, #tpu.memory_space<vmem>>, %arg5: memref<32x32xf32, #tpu.memory_space<vmem>>, %arg6: memref<1x32xf32, #tpu.memory_space<vmem>>, %arg7: memref<32x32xf32, #tpu.memory_space<vmem>>, %arg8: memref<1x32xf32, #tpu.memory_space<vmem>>, %arg9: memref<32x1xf32, #tpu.memory_space<vmem>>, %arg10: memref<8x1xf32, #tpu.memory_space<vmem>>, %arg11: memref<1xf32, #tpu.memory_space<smem>>, %arg12: memref<256x1xf32, #tpu.memory_space<vmem>>) attributes {dimension_semantics = [#tpu.dimension_semantics<parallel>], iteration_bounds = array<i64: 4>, scalar_prefetch = 0 : i64, scratch_operands = 0 : i64, tpu.core_type = #tpu.core_type<tc>, window_params = [{transform_indices = @transform_0, window_bounds = array<i64: 256, 32>}, {transform_indices = @transform_1, window_bounds = array<i64: 256, 32>}, {transform_indices = @transform_2, window_bounds = array<i64: 256, 8>}, {transform_indices = @transform_3, window_bounds = array<i64: 256, 8>}, {pipeline_mode = #tpu.pipeline_mode<synchronous>, transform_indices = @transform_4, window_bounds = array<i64: 32, 32>}, {pipeline_mode = #tpu.pipeline_mode<synchronous>, transform_indices = @transform_5, window_bounds = array<i64: 1, 32>}, {pipeline_mode = #tpu.pipeline_mode<synchronous>, transform_indices = @transform_6, window_bounds = array<i64: 32, 32>}, {pipeline_mode = #tpu.pipeline_mode<synchronous>, transform_indices = @transform_7, window_bounds = array<i64: 1, 32>}, {pipeline_mode = #tpu.pipeline_mode<synchronous>, transform_indices = @transform_8, window_bounds = array<i64: 32, 1>}, {pipeline_mode = #tpu.pipeline_mode<synchronous>, transform_indices = @transform_9, window_bounds = array<i64: 8, 1>}, {transform_indices = @transform_10, window_bounds = array<i64: 1>}, {transform_indices = @transform_11, window_bounds = array<i64: 256, 1>}]} {
    %c0 = arith.constant 0 : index
    %c0_0 = arith.constant 0 : index
    %0 = vector.load %arg1[%c0, %c0_0] : memref<256x32xf32, #tpu.memory_space<vmem>>, vector<256x32xf32>
    %c0_1 = arith.constant 0 : index
    %c0_2 = arith.constant 0 : index
    %1 = vector.load %arg2[%c0_1, %c0_2] : memref<256x32xf32, #tpu.memory_space<vmem>>, vector<256x32xf32>
    %2 = arith.mulf %0, %1 : vector<256x32xf32>
    %c0_3 = arith.constant 0 : index
    %c0_4 = arith.constant 0 : index
    %3 = vector.load %arg3[%c0_3, %c0_4] : memref<256x8xf32, #tpu.memory_space<vmem>>, vector<256x8xf32>
    %c0_5 = arith.constant 0 : index
    %c0_6 = arith.constant 0 : index
    %4 = vector.load %arg4[%c0_5, %c0_6] : memref<256x8xf32, #tpu.memory_space<vmem>>, vector<256x8xf32>
    %5 = arith.subf %3, %4 : vector<256x8xf32>
    %6 = arith.mulf %5, %5 : vector<256x8xf32>
    %c0_7 = arith.constant 0 : index
    %c0_8 = arith.constant 0 : index
    %7 = vector.load %arg10[%c0_7, %c0_8] : memref<8x1xf32, #tpu.memory_space<vmem>>, vector<8x1xf32>
    %cst = arith.constant dense<0.000000e+00> : vector<256x1xf32>
    %8 = tpu.matmul %6, %7, %cst {dimension_numbers = #tpu.dot_dimension_numbers<[1], [0], [0], [1], [0, 0, 1, 1], [], []>} : vector<256x8xf32>, vector<8x1xf32>, vector<256x1xf32> -> vector<256x1xf32>
    %c0_9 = arith.constant 0 : index
    %c0_10 = arith.constant 0 : index
    %9 = vector.load %arg5[%c0_9, %c0_10] : memref<32x32xf32, #tpu.memory_space<vmem>>, vector<32x32xf32>
    %cst_11 = arith.constant dense<0.000000e+00> : vector<256x32xf32>
    %10 = tpu.matmul %2, %9, %cst_11 {dimension_numbers = #tpu.dot_dimension_numbers<[1], [0], [0], [1], [0, 0, 1, 1], [], []>} : vector<256x32xf32>, vector<32x32xf32>, vector<256x32xf32> -> vector<256x32xf32>
    %c0_12 = arith.constant 0 : index
    %c0_13 = arith.constant 0 : index
    %11 = vector.load %arg6[%c0_12, %c0_13] : memref<1x32xf32, #tpu.memory_space<vmem>>, vector<1x32xf32>
    %12 = vector.broadcast %11 : vector<1x32xf32> to vector<256x32xf32>
    %13 = arith.addf %10, %12 : vector<256x32xf32>
    %cst_14 = arith.constant 0.000000e+00 : f32
    %14 = vector.broadcast %cst_14 : f32 to vector<256x32xf32>
    %15 = arith.maximumf %13, %14 : vector<256x32xf32>
    %c0_15 = arith.constant 0 : index
    %c0_16 = arith.constant 0 : index
    %16 = vector.load %arg7[%c0_15, %c0_16] : memref<32x32xf32, #tpu.memory_space<vmem>>, vector<32x32xf32>
    %cst_17 = arith.constant dense<0.000000e+00> : vector<256x32xf32>
    %17 = tpu.matmul %15, %16, %cst_17 {dimension_numbers = #tpu.dot_dimension_numbers<[1], [0], [0], [1], [0, 0, 1, 1], [], []>} : vector<256x32xf32>, vector<32x32xf32>, vector<256x32xf32> -> vector<256x32xf32>
    %c0_18 = arith.constant 0 : index
    %c0_19 = arith.constant 0 : index
    %18 = vector.load %arg8[%c0_18, %c0_19] : memref<1x32xf32, #tpu.memory_space<vmem>>, vector<1x32xf32>
    %19 = vector.broadcast %18 : vector<1x32xf32> to vector<256x32xf32>
    %20 = arith.addf %17, %19 : vector<256x32xf32>
    %cst_20 = arith.constant 0.000000e+00 : f32
    %21 = vector.broadcast %cst_20 : f32 to vector<256x32xf32>
    %22 = arith.maximumf %20, %21 : vector<256x32xf32>
    %c0_21 = arith.constant 0 : index
    %c0_22 = arith.constant 0 : index
    %23 = vector.load %arg9[%c0_21, %c0_22] : memref<32x1xf32, #tpu.memory_space<vmem>>, vector<32x1xf32>
    %cst_23 = arith.constant dense<0.000000e+00> : vector<256x1xf32>
    %24 = tpu.matmul %22, %23, %cst_23 {dimension_numbers = #tpu.dot_dimension_numbers<[1], [0], [0], [1], [0, 0, 1, 1], [], []>} : vector<256x32xf32>, vector<32x1xf32>, vector<256x1xf32> -> vector<256x1xf32>
    %25 = arith.addf %24, %8 : vector<256x1xf32>
    %c0_24 = arith.constant 0 : index
    %26 = memref.load %arg11[%c0_24] : memref<1xf32, #tpu.memory_space<smem>>
    %27 = vector.broadcast %26 : f32 to vector<256x1xf32>
    %28 = arith.addf %25, %27 : vector<256x1xf32>
    %29 = arith.negf %28 : vector<256x1xf32>
    %30 = math.exp %29 : vector<256x1xf32>
    %cst_25 = arith.constant 1.000000e+00 : f32
    %31 = vector.broadcast %cst_25 : f32 to vector<256x1xf32>
    %32 = arith.addf %31, %30 : vector<256x1xf32>
    %33 = arith.divf %31, %32 : vector<256x1xf32>
    %c0_26 = arith.constant 0 : index
    %c0_27 = arith.constant 0 : index
    %34 = vector.load %arg12[%c0_26, %c0_27] : memref<256x1xf32, #tpu.memory_space<vmem>>, vector<256x1xf32>
    tpu.vector_store %arg12[%c0_26, %c0_27], %33 {strides = array<i32>} : memref<256x1xf32, #tpu.memory_space<vmem>>, vector<256x1xf32>,
    return
  }
  func.func @transform_0(%arg0: i32) -> (i32, i32) {
    %c0_i32 = arith.constant 0 : i32
    %c0_i32_0 = arith.constant 0 : i32
    return %arg0, %c0_i32 : i32, i32
  }
  func.func @transform_1(%arg0: i32) -> (i32, i32) {
    %c0_i32 = arith.constant 0 : i32
    %c0_i32_0 = arith.constant 0 : i32
    return %arg0, %c0_i32 : i32, i32
  }
  func.func @transform_2(%arg0: i32) -> (i32, i32) {
    %c0_i32 = arith.constant 0 : i32
    %c0_i32_0 = arith.constant 0 : i32
    return %arg0, %c0_i32 : i32, i32
  }
  func.func @transform_3(%arg0: i32) -> (i32, i32) {
    %c0_i32 = arith.constant 0 : i32
    %c0_i32_0 = arith.constant 0 : i32
    return %arg0, %c0_i32 : i32, i32
  }
  func.func @transform_4(%arg0: i32) -> (i32, i32) {
    %c0_i32 = arith.constant 0 : i32
    %c0_i32_0 = arith.constant 0 : i32
    %c0_i32_1 = arith.constant 0 : i32
    return %c0_i32, %c0_i32_0 : i32, i32
  }
  func.func @transform_5(%arg0: i32) -> (i32, i32) {
    %c0_i32 = arith.constant 0 : i32
    %c0_i32_0 = arith.constant 0 : i32
    %c0_i32_1 = arith.constant 0 : i32
    return %c0_i32, %c0_i32_0 : i32, i32
  }
  func.func @transform_6(%arg0: i32) -> (i32, i32) {
    %c0_i32 = arith.constant 0 : i32
    %c0_i32_0 = arith.constant 0 : i32
    %c0_i32_1 = arith.constant 0 : i32
    return %c0_i32, %c0_i32_0 : i32, i32
  }
  func.func @transform_7(%arg0: i32) -> (i32, i32) {
    %c0_i32 = arith.constant 0 : i32
    %c0_i32_0 = arith.constant 0 : i32
    %c0_i32_1 = arith.constant 0 : i32
    return %c0_i32, %c0_i32_0 : i32, i32
  }
  func.func @transform_8(%arg0: i32) -> (i32, i32) {
    %c0_i32 = arith.constant 0 : i32
    %c0_i32_0 = arith.constant 0 : i32
    %c0_i32_1 = arith.constant 0 : i32
    return %c0_i32, %c0_i32_0 : i32, i32
  }
  func.func @transform_9(%arg0: i32) -> (i32, i32) {
    %c0_i32 = arith.constant 0 : i32
    %c0_i32_0 = arith.constant 0 : i32
    %c0_i32_1 = arith.constant 0 : i32
    return %c0_i32, %c0_i32_0 : i32, i32
  }
  func.func @transform_10(%arg0: i32) -> i32 {
    %c0_i32 = arith.constant 0 : i32
    %c0_i32_0 = arith.constant 0 : i32
    return %c0_i32 : i32
  }
  func.func @transform_11(%arg0: i32) -> (i32, i32) {
    %c0_i32 = arith.constant 0 : i32
    %c0_i32_0 = arith.constant 0 : i32
    return %arg0, %c0_i32 : i32, i32
  }
}

</mosaic_0001>

<llo_original>
// kernel: tpu_custom_call.1
$region0: #{tpu_custom_call.1}
  #allocation0 [shape = 'u32[]', space=smem, size = 0x4, offset = 0x4, fixed_abs, tag = 'smem constant byte address 0x4 - core index']
  #allocation1 [shape = 'u32[144,128]{1,0:T(1,128)}', space=vmem, size = 0x12000, scoped, tag = 'internal scratch']
  #allocation2 [shape = 'f32[1]{0:T(128)S(6)}', space=smem, size = 0x200, scoped, tag = 'scoped memory for tpu_custom_call.1']
  %s0 = inlined_call_operand.vmem [shape: f32[1000,32], index: 0, kind: input, shape index: {}]
  %s1 = inlined_call_operand.vmem [shape: f32[1000,32], index: 1, kind: input, shape index: {}]
  %s2 = inlined_call_operand.vmem [shape: f32[1000,8], index: 2, kind: input, shape index: {}]
  %s3 = inlined_call_operand.vmem [shape: f32[1000,8], index: 3, kind: input, shape index: {}]
  %s4 = inlined_call_operand.vmem [shape: f32[32,32], index: 4, kind: input, shape index: {}]
  %s5 = inlined_call_operand.vmem [shape: f32[1,32], index: 5, kind: input, shape index: {}]
  %s6 = inlined_call_operand.vmem [shape: f32[32,32], index: 6, kind: input, shape index: {}]
  %s7 = inlined_call_operand.vmem [shape: f32[1,32], index: 7, kind: input, shape index: {}]
  %s8 = inlined_call_operand.vmem [shape: f32[32,1], index: 8, kind: input, shape index: {}]
  %s9 = inlined_call_operand.vmem [shape: f32[8,1], index: 9, kind: input, shape index: {}]
  %s10 = inlined_call_operand.<no memory space> [shape: f32[1], index: 10, kind: input, shape index: {}]
  %s11 = inlined_call_operand.vmem [shape: f32[1000,1], index: 11, kind: output, shape index: {}]
  %s12 = sld [smem:[#allocation0]]
  $region125: #{tpu_custom_call.1} parent=0
    _
  %s14 = ssub.s32 1, %s12
  %s15 = scalar_select 0, %s14, %s12
  %16 = sst [smem:[#allocation2]] %s10
  $region1: #{tpu_custom_call.1} parent=0
    #allocation3 [shape = 'u8[262144]{0}', space=vmem, size = 0x40000, scoped, tag = 'output window, operand 0']
    loop: start=0, step=1, limit=6
    $region2: #{tpu_custom_call.1} parent=1 // loop_pre_header
      _
    $region3: #{tpu_custom_call.1} parent=1 // loop_header
      %s18 = sphi 0, %s22
      %p19 = scmp.ge.s32.totalorder %s18, 6
      %s28 = sphi 0, %s30
      %s31 = sphi 0, %s28
      %s32 = sphi 0, %s31
      %s48 = sphi 0, %s32
      %s54 = sphi 0, %s56
      %s57 = sphi 0, %s54
      %s58 = sphi 0, %s57
      %s74 = sphi 0, %s58
      %s80 = sphi 0, %s82
      %s83 = sphi 0, %s80
      %s84 = sphi 0, %s83
      %s100 = sphi 0, %s84
      %s106 = sphi 0, %s108
      %s109 = sphi 0, %s106
      %s110 = sphi 0, %s109
      %s126 = sphi 0, %s110
      %s130 = sphi 0, %s130
      %s132 = sphi 0, %s130
      %s133 = sphi 0, %s132
      %s147 = sphi 0, %s133
      %s151 = sphi 0, %s151
      %s153 = sphi 0, %s151
      %s154 = sphi 0, %s153
      %s168 = sphi 0, %s154
      %s172 = sphi 0, %s172
      %s174 = sphi 0, %s172
      %s175 = sphi 0, %s174
      %s189 = sphi 0, %s175
      %s193 = sphi 0, %s193
      %s195 = sphi 0, %s193
      %s196 = sphi 0, %s195
      %s210 = sphi 0, %s196
      %s214 = sphi 0, %s214
      %s216 = sphi 0, %s214
      %s217 = sphi 0, %s216
      %s231 = sphi 0, %s217
      %s235 = sphi 0, %s235
      %s237 = sphi 0, %s235
      %s238 = sphi 0, %s237
      %s252 = sphi 0, %s238
      %s256 = sphi 0, %s256
      %s258 = sphi 0, %s256
      %s259 = sphi 0, %s258
      %s273 = sphi 0, %s259
      %s279 = sphi 0, %s281
      %s282 = sphi 0, %s279
      %s283 = sphi 0, %s282
      %s299 = sphi 0, %s283
    $region4: #{tpu_custom_call.1} parent=1 // loop_header_branch
      %21 = sbr.rel (%p19) target = $region8
    $region5: #{tpu_custom_call.1} parent=1 // loop_body
      %s23 = ssub.s32 %s18, 1
      %s24 = ssub.s32 %s18, 2
      %s25 = sadd.s32 %s18, 1
      %s26 = ssub.s32 %s18, %s25
      %p27 = scmp.eq.s32.totalorder %s26, 0
      %s29 = sadd.s32 %s28, 1
      %s30 = scalar_select %p27, %s28, %s29
      %p33 = pneg %p27
      %p34 = scmp.eq.s32.totalorder %s18, 3
      %p35 = por %p33, %p34
      %p36 = scmp.ne.s32.totalorder %s28, %s31
      %p37 = scmp.eq.s32.totalorder %s18, 0
      %p38 = por %p36, %p37
      %p39 = scmp.ne.s32.totalorder %s28, %s31
      %p40 = scmp.eq.s32.totalorder %s23, 3
      %p41 = por %p39, %p40
      %p42 = scmp.ne.s32.totalorder %s31, %s32
      %p43 = scmp.eq.s32.totalorder %s23, 0
      %p44 = por %p42, %p43
      %p45 = scmp.ne.s32.totalorder %s31, %s32
      %p46 = scmp.eq.s32.totalorder %s24, 3
      %p47 = por %p45, %p46
      %p49 = scmp.ne.s32.totalorder %s32, %s48
      %p50 = scmp.eq.s32.totalorder %s24, 0
      %p51 = por %p49, %p50
      %s52 = ssub.s32 %s18, %s25
      %p53 = scmp.eq.s32.totalorder %s52, 0
      %s55 = sadd.s32 %s54, 1
      %s56 = scalar_select %p53, %s54, %s55
      %p59 = pneg %p53
      %p60 = scmp.eq.s32.totalorder %s18, 3
      %p61 = por %p59, %p60
      %p62 = scmp.ne.s32.totalorder %s54, %s57
      %p63 = scmp.eq.s32.totalorder %s18, 0
      %p64 = por %p62, %p63
      %p65 = scmp.ne.s32.totalorder %s54, %s57
      %p66 = scmp.eq.s32.totalorder %s23, 3
      %p67 = por %p65, %p66
      %p68 = scmp.ne.s32.totalorder %s57, %s58
      %p69 = scmp.eq.s32.totalorder %s23, 0
      %p70 = por %p68, %p69
      %p71 = scmp.ne.s32.totalorder %s57, %s58
      %p72 = scmp.eq.s32.totalorder %s24, 3
      %p73 = por %p71, %p72
      %p75 = scmp.ne.s32.totalorder %s58, %s74
      %p76 = scmp.eq.s32.totalorder %s24, 0
      %p77 = por %p75, %p76
      %s78 = ssub.s32 %s18, %s25
      %p79 = scmp.eq.s32.totalorder %s78, 0
      %s81 = sadd.s32 %s80, 1
      %s82 = scalar_select %p79, %s80, %s81
      %p85 = pneg %p79
      %p86 = scmp.eq.s32.totalorder %s18, 3
      %p87 = por %p85, %p86
      %p88 = scmp.ne.s32.totalorder %s80, %s83
      %p89 = scmp.eq.s32.totalorder %s18, 0
      %p90 = por %p88, %p89
      %p91 = scmp.ne.s32.totalorder %s80, %s83
      %p92 = scmp.eq.s32.totalorder %s23, 3
      %p93 = por %p91, %p92
      %p94 = scmp.ne.s32.totalorder %s83, %s84
      %p95 = scmp.eq.s32.totalorder %s23, 0
      %p96 = por %p94, %p95
      %p97 = scmp.ne.s32.totalorder %s83, %s84
      %p98 = scmp.eq.s32.totalorder %s24, 3
      %p99 = por %p97, %p98
      %p101 = scmp.ne.s32.totalorder %s84, %s100
      %p102 = scmp.eq.s32.totalorder %s24, 0
      %p103 = por %p101, %p102
      %s104 = ssub.s32 %s18, %s25
      %p105 = scmp.eq.s32.totalorder %s104, 0
      %s107 = sadd.s32 %s106, 1
      %s108 = scalar_select %p105, %s106, %s107
      %p111 = pneg %p105
      %p112 = scmp.eq.s32.totalorder %s18, 3
      %p113 = por %p111, %p112
      %p114 = scmp.ne.s32.totalorder %s106, %s109
      %p115 = scmp.eq.s32.totalorder %s18, 0
      %p116 = por %p114, %p115
      %p117 = scmp.ne.s32.totalorder %s106, %s109
      %p118 = scmp.eq.s32.totalorder %s23, 3
      %p119 = por %p117, %p118
      %p120 = scmp.ne.s32.totalorder %s109, %s110
      %p121 = scmp.eq.s32.totalorder %s23, 0
      %p122 = por %p120, %p121
      %p123 = scmp.ne.s32.totalorder %s109, %s110
      %p124 = scmp.eq.s32.totalorder %s24, 3
      %p125 = por %p123, %p124
      %p127 = scmp.ne.s32.totalorder %s110, %s126
      %p128 = scmp.eq.s32.totalorder %s24, 0
      %p129 = por %p127, %p128
      %s131 = sadd.s32 %s130, 1
      %p134 = scmp.eq.s32.totalorder %s18, 3
      %p135 = scmp.ne.s32.totalorder %s130, %s132
      %p136 = scmp.eq.s32.totalorder %s18, 0
      %p137 = por %p135, %p136
      %p138 = scmp.ne.s32.totalorder %s130, %s132
      %p139 = scmp.eq.s32.totalorder %s23, 3
      %p140 = por %p138, %p139
      %p141 = scmp.ne.s32.totalorder %s132, %s133
      %p142 = scmp.eq.s32.totalorder %s23, 0
      %p143 = por %p141, %p142
      %p144 = scmp.ne.s32.totalorder %s132, %s133
      %p145 = scmp.eq.s32.totalorder %s24, 3
      %p146 = por %p144, %p145
      %p148 = scmp.ne.s32.totalorder %s133, %s147
      %p149 = scmp.eq.s32.totalorder %s24, 0
      %p150 = por %p148, %p149
      %s152 = sadd.s32 %s151, 1
      %p155 = scmp.eq.s32.totalorder %s18, 3
      %p156 = scmp.ne.s32.totalorder %s151, %s153
      %p157 = scmp.eq.s32.totalorder %s18, 0
      %p158 = por %p156, %p157
      %p159 = scmp.ne.s32.totalorder %s151, %s153
      %p160 = scmp.eq.s32.totalorder %s23, 3
      %p161 = por %p159, %p160
      %p162 = scmp.ne.s32.totalorder %s153, %s154
      %p163 = scmp.eq.s32.totalorder %s23, 0
      %p164 = por %p162, %p163
      %p165 = scmp.ne.s32.totalorder %s153, %s154
      %p166 = scmp.eq.s32.totalorder %s24, 3
      %p167 = por %p165, %p166
      %p169 = scmp.ne.s32.totalorder %s154, %s168
      %p170 = scmp.eq.s32.totalorder %s24, 0
      %p171 = por %p169, %p170
      %s173 = sadd.s32 %s172, 1
      %p176 = scmp.eq.s32.totalorder %s18, 3
      %p177 = scmp.ne.s32.totalorder %s172, %s174
      %p178 = scmp.eq.s32.totalorder %s18, 0
      %p179 = por %p177, %p178
      %p180 = scmp.ne.s32.totalorder %s172, %s174
      %p181 = scmp.eq.s32.totalorder %s23, 3
      %p182 = por %p180, %p181
      %p183 = scmp.ne.s32.totalorder %s174, %s175
      %p184 = scmp.eq.s32.totalorder %s23, 0
      %p185 = por %p183, %p184
      %p186 = scmp.ne.s32.totalorder %s174, %s175
      %p187 = scmp.eq.s32.totalorder %s24, 3
      %p188 = por %p186, %p187
      %p190 = scmp.ne.s32.totalorder %s175, %s189
      %p191 = scmp.eq.s32.totalorder %s24, 0
      %p192 = por %p190, %p191
      %s194 = sadd.s32 %s193, 1
      %p197 = scmp.eq.s32.totalorder %s18, 3
      %p198 = scmp.ne.s32.totalorder %s193, %s195
      %p199 = scmp.eq.s32.totalorder %s18, 0
      %p200 = por %p198, %p199
      %p201 = scmp.ne.s32.totalorder %s193, %s195
      %p202 = scmp.eq.s32.totalorder %s23, 3
      %p203 = por %p201, %p202
      %p204 = scmp.ne.s32.totalorder %s195, %s196
      %p205 = scmp.eq.s32.totalorder %s23, 0
      %p206 = por %p204, %p205
      %p207 = scmp.ne.s32.totalorder %s195, %s196
      %p208 = scmp.eq.s32.totalorder %s24, 3
      %p209 = por %p207, %p208
      %p211 = scmp.ne.s32.totalorder %s196, %s210
      %p212 = scmp.eq.s32.totalorder %s24, 0
      %p213 = por %p211, %p212
      %s215 = sadd.s32 %s214, 1
      %p218 = scmp.eq.s32.totalorder %s18, 3
      %p219 = scmp.ne.s32.totalorder %s214, %s216
      %p220 = scmp.eq.s32.totalorder %s18, 0
      %p221 = por %p219, %p220
      %p222 = scmp.ne.s32.totalorder %s214, %s216
      %p223 = scmp.eq.s32.totalorder %s23, 3
      %p224 = por %p222, %p223
      %p225 = scmp.ne.s32.totalorder %s216, %s217
      %p226 = scmp.eq.s32.totalorder %s23, 0
      %p227 = por %p225, %p226
      %p228 = scmp.ne.s32.totalorder %s216, %s217
      %p229 = scmp.eq.s32.totalorder %s24, 3
      %p230 = por %p228, %p229
      %p232 = scmp.ne.s32.totalorder %s217, %s231
      %p233 = scmp.eq.s32.totalorder %s24, 0
      %p234 = por %p232, %p233
      %s236 = sadd.s32 %s235, 1
      %p239 = scmp.eq.s32.totalorder %s18, 3
      %p240 = scmp.ne.s32.totalorder %s235, %s237
      %p241 = scmp.eq.s32.totalorder %s18, 0
      %p242 = por %p240, %p241
      %p243 = scmp.ne.s32.totalorder %s235, %s237
      %p244 = scmp.eq.s32.totalorder %s23, 3
      %p245 = por %p243, %p244
      %p246 = scmp.ne.s32.totalorder %s237, %s238
      %p247 = scmp.eq.s32.totalorder %s23, 0
      %p248 = por %p246, %p247
      %p249 = scmp.ne.s32.totalorder %s237, %s238
      %p250 = scmp.eq.s32.totalorder %s24, 3
      %p251 = por %p249, %p250
      %p253 = scmp.ne.s32.totalorder %s238, %s252
      %p254 = scmp.eq.s32.totalorder %s24, 0
      %p255 = por %p253, %p254
      %s257 = sadd.s32 %s256, 1
      %p260 = scmp.eq.s32.totalorder %s18, 3
      %p261 = scmp.ne.s32.totalorder %s256, %s258
      %p262 = scmp.eq.s32.totalorder %s18, 0
      %p263 = por %p261, %p262
      %p264 = scmp.ne.s32.totalorder %s256, %s258
      %p265 = scmp.eq.s32.totalorder %s23, 3
      %p266 = por %p264, %p265
      %p267 = scmp.ne.s32.totalorder %s258, %s259
      %p268 = scmp.eq.s32.totalorder %s23, 0
      %p269 = por %p267, %p268
      %p270 = scmp.ne.s32.totalorder %s258, %s259
      %p271 = scmp.eq.s32.totalorder %s24, 3
      %p272 = por %p270, %p271
      %p274 = scmp.ne.s32.totalorder %s259, %s273
      %p275 = scmp.eq.s32.totalorder %s24, 0
      %p276 = por %p274, %p275
      %s277 = ssub.s32 %s18, %s25
      %p278 = scmp.eq.s32.totalorder %s277, 0
      %s280 = sadd.s32 %s279, 1
      %s281 = scalar_select %p278, %s279, %s280
      %p284 = pneg %p278
      %p285 = scmp.eq.s32.totalorder %s18, 3
      %p286 = por %p284, %p285
      %p287 = scmp.ne.s32.totalorder %s279, %s282
      %p288 = scmp.eq.s32.totalorder %s18, 0
      %p289 = por %p287, %p288
      %p290 = scmp.ne.s32.totalorder %s279, %s282
      %p291 = scmp.eq.s32.totalorder %s23, 3
      %p292 = por %p290, %p291
      %p293 = scmp.ne.s32.totalorder %s282, %s283
      %p294 = scmp.eq.s32.totalorder %s23, 0
      %p295 = por %p293, %p294
      %p296 = scmp.ne.s32.totalorder %s282, %s283
      %p297 = scmp.eq.s32.totalorder %s24, 3
      %p298 = por %p296, %p297
      %p300 = scmp.ne.s32.totalorder %s283, %s299
      %p301 = scmp.eq.s32.totalorder %s24, 0
      %p302 = por %p300, %p301
      %p303 = scmp.le.s32.totalorder 1, %s18
      %p304 = scmp.lt.s32.totalorder %s18, 5
      %p305 = pnand %p303, %p304
      %p306 = pneg %p305
      // Predicated region
      $region9: #{tpu_custom_call.1} parent=5 // pred_check
        _
      $region10: #{tpu_custom_call.1} parent=5 // pred_check_branch
        %308 = sbr.rel (%p305) target = $region12
      $region11: #{tpu_custom_call.1} parent=5 // pred_region
        %s309 = ssub.s32 %s18, 1
        // Predicated region
        $region13: #{tpu_custom_call.1} parent=11 // pred_check
          %p310 = pneg %p143
        $region14: #{tpu_custom_call.1} parent=11 // pred_check_branch
          %312 = sbr.rel (%p310) target = $region16
        $region15: #{tpu_custom_call.1} parent=11 // pred_region
          _
        $region16: #{tpu_custom_call.1} parent=11 // pred_fallthru
          _
        // Predicated region
        $region17: #{tpu_custom_call.1} parent=11 // pred_check
          %p313 = pneg %p164
        $region18: #{tpu_custom_call.1} parent=11 // pred_check_branch
          %315 = sbr.rel (%p313) target = $region20
        $region19: #{tpu_custom_call.1} parent=11 // pred_region
          _
        $region20: #{tpu_custom_call.1} parent=11 // pred_fallthru
          _
        // Predicated region
        $region21: #{tpu_custom_call.1} parent=11 // pred_check
          %p316 = pneg %p185
        $region22: #{tpu_custom_call.1} parent=11 // pred_check_branch
          %318 = sbr.rel (%p316) target = $region24
        $region23: #{tpu_custom_call.1} parent=11 // pred_region
          _
        $region24: #{tpu_custom_call.1} parent=11 // pred_fallthru
          _
        // Predicated region
        $region25: #{tpu_custom_call.1} parent=11 // pred_check
          %p319 = pneg %p206
        $region26: #{tpu_custom_call.1} parent=11 // pred_check_branch
          %321 = sbr.rel (%p319) target = $region28
        $region27: #{tpu_custom_call.1} parent=11 // pred_region
          _
        $region28: #{tpu_custom_call.1} parent=11 // pred_fallthru
          _
        // Predicated region
        $region29: #{tpu_custom_call.1} parent=11 // pred_check
          %p322 = pneg %p227
        $region30: #{tpu_custom_call.1} parent=11 // pred_check_branch
          %324 = sbr.rel (%p322) target = $region32
        $region31: #{tpu_custom_call.1} parent=11 // pred_region
          _
        $region32: #{tpu_custom_call.1} parent=11 // pred_fallthru
          _
        // Predicated region
        $region33: #{tpu_custom_call.1} parent=11 // pred_check
          %p325 = pneg %p248
        $region34: #{tpu_custom_call.1} parent=11 // pred_check_branch
          %327 = sbr.rel (%p325) target = $region36
        $region35: #{tpu_custom_call.1} parent=11 // pred_region
          _
        $region36: #{tpu_custom_call.1} parent=11 // pred_fallthru
          _
        // Predicated region
        $region37: #{tpu_custom_call.1} parent=11 // pred_check
          %p328 = pneg %p269
        $region38: #{tpu_custom_call.1} parent=11 // pred_check_branch
          %330 = sbr.rel (%p328) target = $region40
        $region39: #{tpu_custom_call.1} parent=11 // pred_region
          _
        $region40: #{tpu_custom_call.1} parent=11 // pred_fallthru
          _
      $region12: #{tpu_custom_call.1} parent=5 // pred_fallthru
        _
      %p331 = scmp.lt.s32.totalorder %s18, 4
      // Predicated region
      $region41: #{tpu_custom_call.1} parent=5 // pred_check
        %p332 = pneg %p331
      $region42: #{tpu_custom_call.1} parent=5 // pred_check_branch
        %334 = sbr.rel (%p332) target = $region44
      $region43: #{tpu_custom_call.1} parent=5 // pred_region
        // Predicated region
        $region45: #{tpu_custom_call.1} parent=43 // pred_check
          %p335 = pneg %p38
        $region46: #{tpu_custom_call.1} parent=43 // pred_check_branch
          %337 = sbr.rel (%p335) target = $region48
        $region47: #{tpu_custom_call.1} parent=43 // pred_region
          %s338 = smul.u32 32, %s18
          %s339 = ssub.s32 125, %s338
          %p340 = scmp.lt.s32.totalorder %s339, 32
          %s341 = scalar_select %p340, %s339, 32
          %s342 = smul.u32 128, %s341
          %p343 = scmp.lt.s32.totalorder %s338, 124
          %s344 = scalar_select %p343, %s338, 124
          %s345 = smul.addr %s344, 8
          %s346 = scalar_lea.vmem %s0, %s345
          %s347 = smul.u32 32, %s18
          %s348 = ssub.s32 125, %s347
          %p349 = scmp.lt.s32.totalorder %s348, 32
          %s350 = scalar_select %p349, %s348, 32
          %s351 = smul.u32 128, %s350
        $region48: #{tpu_custom_call.1} parent=43 // pred_fallthru
          _
        // Predicated region
        $region49: #{tpu_custom_call.1} parent=43 // pred_check
          %p352 = pneg %p64
        $region50: #{tpu_custom_call.1} parent=43 // pred_check_branch
          %354 = sbr.rel (%p352) target = $region52
        $region51: #{tpu_custom_call.1} parent=43 // pred_region
          %s355 = smul.u32 32, %s18
          %s356 = ssub.s32 125, %s355
          %p357 = scmp.lt.s32.totalorder %s356, 32
          %s358 = scalar_select %p357, %s356, 32
          %s359 = smul.u32 128, %s358
          %p360 = scmp.lt.s32.totalorder %s355, 124
          %s361 = scalar_select %p360, %s355, 124
          %s362 = smul.addr %s361, 8
          %s363 = scalar_lea.vmem %s1, %s362
          %s364 = smul.u32 32, %s18
          %s365 = ssub.s32 125, %s364
          %p366 = scmp.lt.s32.totalorder %s365, 32
          %s367 = scalar_select %p366, %s365, 32
          %s368 = smul.u32 128, %s367
        $region52: #{tpu_custom_call.1} parent=43 // pred_fallthru
          _
        // Predicated region
        $region53: #{tpu_custom_call.1} parent=43 // pred_check
          %p369 = pneg %p90
        $region54: #{tpu_custom_call.1} parent=43 // pred_check_branch
          %371 = sbr.rel (%p369) target = $region56
        $region55: #{tpu_custom_call.1} parent=43 // pred_region
          %s372 = smul.u32 32, %s18
          %s373 = ssub.s32 125, %s372
          %p374 = scmp.lt.s32.totalorder %s373, 32
          %s375 = scalar_select %p374, %s373, 32
          %s376 = smul.u32 128, %s375
          %p377 = scmp.lt.s32.totalorder %s372, 124
          %s378 = scalar_select %p377, %s372, 124
          %s379 = smul.addr %s378, 8
          %s380 = scalar_lea.vmem %s2, %s379
          %s381 = smul.u32 32, %s18
          %s382 = ssub.s32 125, %s381
          %p383 = scmp.lt.s32.totalorder %s382, 32
          %s384 = scalar_select %p383, %s382, 32
          %s385 = smul.u32 128, %s384
        $region56: #{tpu_custom_call.1} parent=43 // pred_fallthru
          _
        // Predicated region
        $region57: #{tpu_custom_call.1} parent=43 // pred_check
          %p386 = pneg %p116
        $region58: #{tpu_custom_call.1} parent=43 // pred_check_branch
          %388 = sbr.rel (%p386) target = $region60
        $region59: #{tpu_custom_call.1} parent=43 // pred_region
          %s389 = smul.u32 32, %s18
          %s390 = ssub.s32 125, %s389
          %p391 = scmp.lt.s32.totalorder %s390, 32
          %s392 = scalar_select %p391, %s390, 32
          %s393 = smul.u32 128, %s392
          %p394 = scmp.lt.s32.totalorder %s389, 124
          %s395 = scalar_select %p394, %s389, 124
          %s396 = smul.addr %s395, 8
          %s397 = scalar_lea.vmem %s3, %s396
          %s398 = smul.u32 32, %s18
          %s399 = ssub.s32 125, %s398
          %p400 = scmp.lt.s32.totalorder %s399, 32
          %s401 = scalar_select %p400, %s399, 32
          %s402 = smul.u32 128, %s401
        $region60: #{tpu_custom_call.1} parent=43 // pred_fallthru
          _
      $region44: #{tpu_custom_call.1} parent=5 // pred_fallthru
        _
      %p403 = scmp.le.s32.totalorder 1, %s18
      %p404 = scmp.lt.s32.totalorder %s18, 5
      %p405 = pnand %p403, %p404
      %p406 = pneg %p405
      // Predicated region
      $region61: #{tpu_custom_call.1} parent=5 // pred_check
        _
      $region62: #{tpu_custom_call.1} parent=5 // pred_check_branch
        %408 = sbr.rel (%p405) target = $region64
      $region63: #{tpu_custom_call.1} parent=5 // pred_region
        %s409 = ssub.s32 %s18, 1
        %s410 = smul.u32 32, %s23
        %s411 = ssub.s32 125, %s410
        %p412 = scmp.lt.s32.totalorder %s411, 32
        %s413 = scalar_select %p412, %s411, 32
        %s414 = smul.u32 128, %s413
        %p415 = scmp.lt.s32.totalorder %s410, 124
        %s416 = scalar_select %p415, %s410, 124
        %s417 = smul.addr %s416, 8
        %s418 = scalar_lea.vmem %s0, %s417
        %p419 = pneg %p44
        %p420 = pneg %p41
        %s421 = smul.u32 32, %s23
        %s422 = ssub.s32 125, %s421
        %p423 = scmp.lt.s32.totalorder %s422, 32
        %s424 = scalar_select %p423, %s422, 32
        %s425 = smul.u32 128, %s424
        %p426 = scmp.lt.s32.totalorder %s421, 124
        %s427 = scalar_select %p426, %s421, 124
        %s428 = smul.addr %s427, 8
        %s429 = scalar_lea.vmem %s1, %s428
        %p430 = pneg %p70
        %p431 = pneg %p67
        %s432 = smul.u32 32, %s23
        %s433 = ssub.s32 125, %s432
        %p434 = scmp.lt.s32.totalorder %s433, 32
        %s435 = scalar_select %p434, %s433, 32
        %s436 = smul.u32 128, %s435
        %p437 = scmp.lt.s32.totalorder %s432, 124
        %s438 = scalar_select %p437, %s432, 124
        %s439 = smul.addr %s438, 8
        %s440 = scalar_lea.vmem %s2, %s439
        %p441 = pneg %p96
        %p442 = pneg %p93
        %s443 = smul.u32 32, %s23
        %s444 = ssub.s32 125, %s443
        %p445 = scmp.lt.s32.totalorder %s444, 32
        %s446 = scalar_select %p445, %s444, 32
        %s447 = smul.u32 128, %s446
        %p448 = scmp.lt.s32.totalorder %s443, 124
        %s449 = scalar_select %p448, %s443, 124
        %s450 = smul.addr %s449, 8
        %s451 = scalar_lea.vmem %s3, %s450
        %p452 = pneg %p122
        %p453 = pneg %p119
        %p454 = pneg %p143
        %p455 = pneg %p140
        %p456 = pneg %p164
        %p457 = pneg %p161
        %p458 = pneg %p185
        %p459 = pneg %p182
        %p460 = pneg %p206
        %p461 = pneg %p203
        %p462 = pneg %p227
        %p463 = pneg %p224
        %p464 = pneg %p248
        %p465 = pneg %p245
        %p466 = pneg %p269
        %p467 = pneg %p266
        %p468 = pneg %p295
        %p469 = pneg %p292
        %s470 = sand.u32 %s282, 1
        %s471 = sand.u32 %s282, 1
        %s472 = smul.addr %s471, 256
        %s473 = scalar_lea.vmem [#allocation3], %s472
        %s474 = smul.u32 32, %s23
        %s475 = ssub.s32 125, %s474
        %p476 = scmp.lt.s32.totalorder %s475, 32
        %s477 = scalar_select %p476, %s475, 32
        %s478 = smul.u32 128, %s477
        %p479 = scmp.lt.s32.totalorder %s474, 124
        %s480 = scalar_select %p479, %s474, 124
        %s481 = smul.addr %s480, 8
        %s482 = scalar_lea.vmem %s0, %s481
        %s483 = smul.u32 32, %s23
        %s484 = ssub.s32 125, %s483
        %p485 = scmp.lt.s32.totalorder %s484, 32
        %s486 = scalar_select %p485, %s484, 32
        %s487 = smul.u32 128, %s486
        %s488 = smul.u32 32, %s23
        %s489 = ssub.s32 125, %s488
        %p490 = scmp.lt.s32.totalorder %s489, 32
        %s491 = scalar_select %p490, %s489, 32
        %s492 = smul.u32 128, %s491
        %p493 = scmp.lt.s32.totalorder %s488, 124
        %s494 = scalar_select %p493, %s488, 124
        %s495 = smul.addr %s494, 8
        %s496 = scalar_lea.vmem %s1, %s495
        %s497 = smul.u32 32, %s23
        %s498 = ssub.s32 125, %s497
        %p499 = scmp.lt.s32.totalorder %s498, 32
        %s500 = scalar_select %p499, %s498, 32
        %s501 = smul.u32 128, %s500
        %s502 = smul.u32 32, %s23
        %s503 = ssub.s32 125, %s502
        %p504 = scmp.lt.s32.totalorder %s503, 32
        %s505 = scalar_select %p504, %s503, 32
        %s506 = smul.u32 128, %s505
        %p507 = scmp.lt.s32.totalorder %s502, 124
        %s508 = scalar_select %p507, %s502, 124
        %s509 = smul.addr %s508, 8
        %s510 = scalar_lea.vmem %s2, %s509
        %s511 = smul.u32 32, %s23
        %s512 = ssub.s32 125, %s511
        %p513 = scmp.lt.s32.totalorder %s512, 32
        %s514 = scalar_select %p513, %s512, 32
        %s515 = smul.u32 128, %s514
        %s516 = smul.u32 32, %s23
        %s517 = ssub.s32 125, %s516
        %p518 = scmp.lt.s32.totalorder %s517, 32
        %s519 = scalar_select %p518, %s517, 32
        %s520 = smul.u32 128, %s519
        %p521 = scmp.lt.s32.totalorder %s516, 124
        %s522 = scalar_select %p521, %s516, 124
        %s523 = smul.addr %s522, 8
        %s524 = scalar_lea.vmem %s3, %s523
        %s525 = smul.u32 32, %s23
        %s526 = ssub.s32 125, %s525
        %p527 = scmp.lt.s32.totalorder %s526, 32
        %s528 = scalar_select %p527, %s526, 32
        %s529 = smul.u32 128, %s528
        %s530 = smul.u32 32, %s23
        %s531 = ssub.s32 125, %s530
        %p532 = scmp.lt.s32.totalorder %s531, 32
        %s533 = scalar_select %p532, %s531, 32
        %s534 = smul.u32 128, %s533
        %v535 = vld [vmem:[%s482] sm:$0xff]
        %v536 = vld [vmem:[%s482 + $0x8] sm:$0xff]
        %v537 = vld [vmem:[%s482 + $0x10] sm:$0xff]
        %v538 = vld [vmem:[%s482 + $0x18] sm:$0xff]
        %v539 = vld [vmem:[%s482 + $0x20] sm:$0xff]
        %v540 = vld [vmem:[%s482 + $0x28] sm:$0xff]
        %v541 = vld [vmem:[%s482 + $0x30] sm:$0xff]
        %v542 = vld [vmem:[%s482 + $0x38] sm:$0xff]
        %v543 = vld [vmem:[%s482 + $0x40] sm:$0xff]
        %v544 = vld [vmem:[%s482 + $0x48] sm:$0xff]
        %v545 = vld [vmem:[%s482 + $0x50] sm:$0xff]
        %v546 = vld [vmem:[%s482 + $0x58] sm:$0xff]
        %v547 = vld [vmem:[%s482 + $0x60] sm:$0xff]
        %v548 = vld [vmem:[%s482 + $0x68] sm:$0xff]
        %v549 = vld [vmem:[%s482 + $0x70] sm:$0xff]
        %v550 = vld [vmem:[%s482 + $0x78] sm:$0xff]
        %v551 = vld [vmem:[%s482 + $0x80] sm:$0xff]
        %v552 = vld [vmem:[%s482 + $0x88] sm:$0xff]
        %v553 = vld [vmem:[%s482 + $0x90] sm:$0xff]
        %v554 = vld [vmem:[%s482 + $0x98] sm:$0xff]
        %v555 = vld [vmem:[%s482 + $0xa0] sm:$0xff]
        %v556 = vld [vmem:[%s482 + $0xa8] sm:$0xff]
        %v557 = vld [vmem:[%s482 + $0xb0] sm:$0xff]
        %v558 = vld [vmem:[%s482 + $0xb8] sm:$0xff]
        %v559 = vld [vmem:[%s482 + $0xc0] sm:$0xff]
        %v560 = vld [vmem:[%s482 + $0xc8] sm:$0xff]
        %v561 = vld [vmem:[%s482 + $0xd0] sm:$0xff]
        %v562 = vld [vmem:[%s482 + $0xd8] sm:$0xff]
        %v563 = vld [vmem:[%s482 + $0xe0] sm:$0xff]
        %v564 = vld [vmem:[%s482 + $0xe8] sm:$0xff]
        %v565 = vld [vmem:[%s482 + $0xf0] sm:$0xff]
        %v566 = vld [vmem:[%s482 + $0xf8] sm:$0xff]
        %v567 = vld [vmem:[%s496] sm:$0xff]
        %v568 = vld [vmem:[%s496 + $0x8] sm:$0xff]
        %v569 = vld [vmem:[%s496 + $0x10] sm:$0xff]
        %v570 = vld [vmem:[%s496 + $0x18] sm:$0xff]
        %v571 = vld [vmem:[%s496 + $0x20] sm:$0xff]
        %v572 = vld [vmem:[%s496 + $0x28] sm:$0xff]
        %v573 = vld [vmem:[%s496 + $0x30] sm:$0xff]
        %v574 = vld [vmem:[%s496 + $0x38] sm:$0xff]
        %v575 = vld [vmem:[%s496 + $0x40] sm:$0xff]
        %v576 = vld [vmem:[%s496 + $0x48] sm:$0xff]
        %v577 = vld [vmem:[%s496 + $0x50] sm:$0xff]
        %v578 = vld [vmem:[%s496 + $0x58] sm:$0xff]
        %v579 = vld [vmem:[%s496 + $0x60] sm:$0xff]
        %v580 = vld [vmem:[%s496 + $0x68] sm:$0xff]
        %v581 = vld [vmem:[%s496 + $0x70] sm:$0xff]
        %v582 = vld [vmem:[%s496 + $0x78] sm:$0xff]
        %v583 = vld [vmem:[%s496 + $0x80] sm:$0xff]
        %v584 = vld [vmem:[%s496 + $0x88] sm:$0xff]
        %v585 = vld [vmem:[%s496 + $0x90] sm:$0xff]
        %v586 = vld [vmem:[%s496 + $0x98] sm:$0xff]
        %v587 = vld [vmem:[%s496 + $0xa0] sm:$0xff]
        %v588 = vld [vmem:[%s496 + $0xa8] sm:$0xff]
        %v589 = vld [vmem:[%s496 + $0xb0] sm:$0xff]
        %v590 = vld [vmem:[%s496 + $0xb8] sm:$0xff]
        %v591 = vld [vmem:[%s496 + $0xc0] sm:$0xff]
        %v592 = vld [vmem:[%s496 + $0xc8] sm:$0xff]
        %v593 = vld [vmem:[%s496 + $0xd0] sm:$0xff]
        %v594 = vld [vmem:[%s496 + $0xd8] sm:$0xff]
        %v595 = vld [vmem:[%s496 + $0xe0] sm:$0xff]
        %v596 = vld [vmem:[%s496 + $0xe8] sm:$0xff]
        %v597 = vld [vmem:[%s496 + $0xf0] sm:$0xff]
        %v598 = vld [vmem:[%s496 + $0xf8] sm:$0xff]
        %v599 = vmul.f32 %v535, %v567
        %v600 = vmul.f32 %v536, %v568
        %v601 = vmul.f32 %v537, %v569
        %v602 = vmul.f32 %v538, %v570
        %v603 = vmul.f32 %v539, %v571
        %v604 = vmul.f32 %v540, %v572
        %v605 = vmul.f32 %v541, %v573
        %v606 = vmul.f32 %v542, %v574
        %v607 = vmul.f32 %v543, %v575
        %v608 = vmul.f32 %v544, %v576
        %v609 = vmul.f32 %v545, %v577
        %v610 = vmul.f32 %v546, %v578
        %v611 = vmul.f32 %v547, %v579
        %v612 = vmul.f32 %v548, %v580
        %v613 = vmul.f32 %v549, %v581
        %v614 = vmul.f32 %v550, %v582
        %v615 = vmul.f32 %v551, %v583
        %v616 = vmul.f32 %v552, %v584
        %v617 = vmul.f32 %v553, %v585
        %v618 = vmul.f32 %v554, %v586
        %v619 = vmul.f32 %v555, %v587
        %v620 = vmul.f32 %v556, %v588
        %v621 = vmul.f32 %v557, %v589
        %v622 = vmul.f32 %v558, %v590
        %v623 = vmul.f32 %v559, %v591
        %v624 = vmul.f32 %v560, %v592
        %v625 = vmul.f32 %v561, %v593
        %v626 = vmul.f32 %v562, %v594
        %v627 = vmul.f32 %v563, %v595
        %v628 = vmul.f32 %v564, %v596
        %v629 = vmul.f32 %v565, %v597
        %v630 = vmul.f32 %v566, %v598
        %v631 = vld [vmem:[%s510] sm:$0xff]
        %v632 = vld [vmem:[%s510 + $0x8] sm:$0xff]
        %v633 = vld [vmem:[%s510 + $0x10] sm:$0xff]
        %v634 = vld [vmem:[%s510 + $0x18] sm:$0xff]
        %v635 = vld [vmem:[%s510 + $0x20] sm:$0xff]
        %v636 = vld [vmem:[%s510 + $0x28] sm:$0xff]
        %v637 = vld [vmem:[%s510 + $0x30] sm:$0xff]
        %v638 = vld [vmem:[%s510 + $0x38] sm:$0xff]
        %v639 = vld [vmem:[%s510 + $0x40] sm:$0xff]
        %v640 = vld [vmem:[%s510 + $0x48] sm:$0xff]
        %v641 = vld [vmem:[%s510 + $0x50] sm:$0xff]
        %v642 = vld [vmem:[%s510 + $0x58] sm:$0xff]
        %v643 = vld [vmem:[%s510 + $0x60] sm:$0xff]
        %v644 = vld [vmem:[%s510 + $0x68] sm:$0xff]
        %v645 = vld [vmem:[%s510 + $0x70] sm:$0xff]
        %v646 = vld [vmem:[%s510 + $0x78] sm:$0xff]
        %v647 = vld [vmem:[%s510 + $0x80] sm:$0xff]
        %v648 = vld [vmem:[%s510 + $0x88] sm:$0xff]
        %v649 = vld [vmem:[%s510 + $0x90] sm:$0xff]
        %v650 = vld [vmem:[%s510 + $0x98] sm:$0xff]
        %v651 = vld [vmem:[%s510 + $0xa0] sm:$0xff]
        %v652 = vld [vmem:[%s510 + $0xa8] sm:$0xff]
        %v653 = vld [vmem:[%s510 + $0xb0] sm:$0xff]
        %v654 = vld [vmem:[%s510 + $0xb8] sm:$0xff]
        %v655 = vld [vmem:[%s510 + $0xc0] sm:$0xff]
        %v656 = vld [vmem:[%s510 + $0xc8] sm:$0xff]
        %v657 = vld [vmem:[%s510 + $0xd0] sm:$0xff]
        %v658 = vld [vmem:[%s510 + $0xd8] sm:$0xff]
        %v659 = vld [vmem:[%s510 + $0xe0] sm:$0xff]
        %v660 = vld [vmem:[%s510 + $0xe8] sm:$0xff]
        %v661 = vld [vmem:[%s510 + $0xf0] sm:$0xff]
        %v662 = vld [vmem:[%s510 + $0xf8] sm:$0xff]
        %v663 = vld [vmem:[%s524] sm:$0xff]
        %v664 = vld [vmem:[%s524 + $0x8] sm:$0xff]
        %v665 = vld [vmem:[%s524 + $0x10] sm:$0xff]
        %v666 = vld [vmem:[%s524 + $0x18] sm:$0xff]
        %v667 = vld [vmem:[%s524 + $0x20] sm:$0xff]
        %v668 = vld [vmem:[%s524 + $0x28] sm:$0xff]
        %v669 = vld [vmem:[%s524 + $0x30] sm:$0xff]
        %v670 = vld [vmem:[%s524 + $0x38] sm:$0xff]
        %v671 = vld [vmem:[%s524 + $0x40] sm:$0xff]
        %v672 = vld [vmem:[%s524 + $0x48] sm:$0xff]
        %v673 = vld [vmem:[%s524 + $0x50] sm:$0xff]
        %v674 = vld [vmem:[%s524 + $0x58] sm:$0xff]
        %v675 = vld [vmem:[%s524 + $0x60] sm:$0xff]
        %v676 = vld [vmem:[%s524 + $0x68] sm:$0xff]
        %v677 = vld [vmem:[%s524 + $0x70] sm:$0xff]
        %v678 = vld [vmem:[%s524 + $0x78] sm:$0xff]
        %v679 = vld [vmem:[%s524 + $0x80] sm:$0xff]
        %v680 = vld [vmem:[%s524 + $0x88] sm:$0xff]
        %v681 = vld [vmem:[%s524 + $0x90] sm:$0xff]
        %v682 = vld [vmem:[%s524 + $0x98] sm:$0xff]
        %v683 = vld [vmem:[%s524 + $0xa0] sm:$0xff]
        %v684 = vld [vmem:[%s524 + $0xa8] sm:$0xff]
        %v685 = vld [vmem:[%s524 + $0xb0] sm:$0xff]
        %v686 = vld [vmem:[%s524 + $0xb8] sm:$0xff]
        %v687 = vld [vmem:[%s524 + $0xc0] sm:$0xff]
        %v688 = vld [vmem:[%s524 + $0xc8] sm:$0xff]
        %v689 = vld [vmem:[%s524 + $0xd0] sm:$0xff]
        %v690 = vld [vmem:[%s524 + $0xd8] sm:$0xff]
        %v691 = vld [vmem:[%s524 + $0xe0] sm:$0xff]
        %v692 = vld [vmem:[%s524 + $0xe8] sm:$0xff]
        %v693 = vld [vmem:[%s524 + $0xf0] sm:$0xff]
        %v694 = vld [vmem:[%s524 + $0xf8] sm:$0xff]
        %v695 = vsub.f32 %v631, %v663
        %v696 = vsub.f32 %v632, %v664
        %v697 = vsub.f32 %v633, %v665
        %v698 = vsub.f32 %v634, %v666
        %v699 = vsub.f32 %v635, %v667
        %v700 = vsub.f32 %v636, %v668
        %v701 = vsub.f32 %v637, %v669
        %v702 = vsub.f32 %v638, %v670
        %v703 = vsub.f32 %v639, %v671
        %v704 = vsub.f32 %v640, %v672
        %v705 = vsub.f32 %v641, %v673
        %v706 = vsub.f32 %v642, %v674
        %v707 = vsub.f32 %v643, %v675
        %v708 = vsub.f32 %v644, %v676
        %v709 = vsub.f32 %v645, %v677
        %v710 = vsub.f32 %v646, %v678
        %v711 = vsub.f32 %v647, %v679
        %v712 = vsub.f32 %v648, %v680
        %v713 = vsub.f32 %v649, %v681
        %v714 = vsub.f32 %v650, %v682
        %v715 = vsub.f32 %v651, %v683
        %v716 = vsub.f32 %v652, %v684
        %v717 = vsub.f32 %v653, %v685
        %v718 = vsub.f32 %v654, %v686
        %v719 = vsub.f32 %v655, %v687
        %v720 = vsub.f32 %v656, %v688
        %v721 = vsub.f32 %v657, %v689
        %v722 = vsub.f32 %v658, %v690
        %v723 = vsub.f32 %v659, %v691
        %v724 = vsub.f32 %v660, %v692
        %v725 = vsub.f32 %v661, %v693
        %v726 = vsub.f32 %v662, %v694
        %v727 = vmul.f32 %v695, %v695
        %v728 = vmul.f32 %v696, %v696
        %v729 = vmul.f32 %v697, %v697
        %v730 = vmul.f32 %v698, %v698
        %v731 = vmul.f32 %v699, %v699
        %v732 = vmul.f32 %v700, %v700
        %v733 = vmul.f32 %v701, %v701
        %v734 = vmul.f32 %v702, %v702
        %v735 = vmul.f32 %v703, %v703
        %v736 = vmul.f32 %v704, %v704
        %v737 = vmul.f32 %v705, %v705
        %v738 = vmul.f32 %v706, %v706
        %v739 = vmul.f32 %v707, %v707
        %v740 = vmul.f32 %v708, %v708
        %v741 = vmul.f32 %v709, %v709
        %v742 = vmul.f32 %v710, %v710
        %v743 = vmul.f32 %v711, %v711
        %v744 = vmul.f32 %v712, %v712
        %v745 = vmul.f32 %v713, %v713
        %v746 = vmul.f32 %v714, %v714
        %v747 = vmul.f32 %v715, %v715
        %v748 = vmul.f32 %v716, %v716
        %v749 = vmul.f32 %v717, %v717
        %v750 = vmul.f32 %v718, %v718
        %v751 = vmul.f32 %v719, %v719
        %v752 = vmul.f32 %v720, %v720
        %v753 = vmul.f32 %v721, %v721
        %v754 = vmul.f32 %v722, %v722
        %v755 = vmul.f32 %v723, %v723
        %v756 = vmul.f32 %v724, %v724
        %v757 = vmul.f32 %v725, %v725
        %v758 = vmul.f32 %v726, %v726
        %v759 = vld [vmem:[%s9] sm:$0xff]
        %vm760 = vcmask 64512
        %v762 = vsel %vm760, %v727, 0
        %v765 = vsel %vm760, %v728, 0
        %v768 = vsel %vm760, %v729, 0
        %v771 = vsel %vm760, %v730, 0
        %v774 = vsel %vm760, %v731, 0
        %v777 = vsel %vm760, %v732, 0
        %v780 = vsel %vm760, %v733, 0
        %v783 = vsel %vm760, %v734, 0
        %v786 = vsel %vm760, %v735, 0
        %v789 = vsel %vm760, %v736, 0
        %v792 = vsel %vm760, %v737, 0
        %v795 = vsel %vm760, %v738, 0
        %v798 = vsel %vm760, %v739, 0
        %v801 = vsel %vm760, %v740, 0
        %v804 = vsel %vm760, %v741, 0
        %v807 = vsel %vm760, %v742, 0
        %v810 = vsel %vm760, %v743, 0
        %v813 = vsel %vm760, %v744, 0
        %v816 = vsel %vm760, %v745, 0
        %v819 = vsel %vm760, %v746, 0
        %v822 = vsel %vm760, %v747, 0
        %v825 = vsel %vm760, %v748, 0
        %v828 = vsel %vm760, %v749, 0
        %v831 = vsel %vm760, %v750, 0
        %v834 = vsel %vm760, %v751, 0
        %v837 = vsel %vm760, %v752, 0
        %v840 = vsel %vm760, %v753, 0
        %v843 = vsel %vm760, %v754, 0
        %v846 = vsel %vm760, %v755, 0
        %v849 = vsel %vm760, %v756, 0
        %v852 = vsel %vm760, %v757, 0
        %v855 = vsel %vm760, %v758, 0
        %857 = vmatprep.subr.mxu0 0.0
        %858 = vmatpush1.msra.mxu0 %v759
        %859 = vmatprep.subr.mxu0 0.0
        %860 = vmatpush1.msra.mxu0 0.0
        %861 = vmatprep.subr.mxu0 0.0
        %862 = vmatpush1.msra.mxu0 0.0
        %863 = vmatprep.subr.mxu0 0.0
        %864 = vmatpush1.msra.mxu0 0.0
        %865 = vmatprep.subr.mxu0 0.0
        %866 = vmatpush1.msra.mxu0 0.0
        %867 = vmatprep.subr.mxu0 0.0
        %868 = vmatpush1.msra.mxu0 0.0
        %869 = vmatprep.subr.mxu0 0.0
        %870 = vmatpush1.msra.mxu0 0.0
        %871 = vmatprep.subr.mxu0 0.0
        %872 = vmatpush1.msra.mxu0 0.0
        %873 = vmatprep.subr.mxu0 0.0
        %874 = vmatpush1.msra.mxu0 0.0
        %875 = vmatprep.subr.mxu0 0.0
        %876 = vmatpush1.msra.mxu0 0.0
        %877 = vmatprep.subr.mxu0 0.0
        %878 = vmatpush1.msra.mxu0 0.0
        %879 = vmatprep.subr.mxu0 0.0
        %880 = vmatpush1.msra.mxu0 0.0
        %881 = vmatprep.subr.mxu0 0.0
        %882 = vmatpush1.msra.mxu0 0.0
        %883 = vmatprep.subr.mxu0 0.0
        %884 = vmatpush1.msra.mxu0 0.0
        %885 = vmatprep.subr.mxu0 0.0
        %886 = vmatpush1.msra.mxu0 0.0
        %887 = vmatprep.subr.mxu0 0.0
        %888 = vmatpush1.msra.mxu0 0.0
        %889 = vmatprep.subr.mxu0 0.0
        %890 = vmatpush1.msra.mxu0 0.0
        %891 = vmatprep.subr.mxu0 0.0
        %892 = vmatpush1.msra.mxu0 0.0
        %893 = vmatprep.subr.mxu0 0.0
        %894 = vmatpush1.msra.mxu0 0.0
        %895 = vmatprep.subr.mxu0 0.0
        %896 = vmatpush1.msra.mxu0 0.0
        %897 = vmatprep.subr.mxu0 0.0
        %898 = vmatpush1.msra.mxu0 0.0
        %899 = vmatprep.subr.mxu0 0.0
        %900 = vmatpush1.msra.mxu0 0.0
        %901 = vmatprep.subr.mxu0 0.0
        %902 = vmatpush1.msra.mxu0 0.0
        %903 = vmatprep.subr.mxu0 0.0
        %904 = vmatpush1.msra.mxu0 0.0
        %905 = vmatprep.subr.mxu0 0.0
        %906 = vmatpush1.msra.mxu0 0.0
        %907 = vmatprep.subr.mxu0 0.0
        %908 = vmatpush1.msra.mxu0 0.0
        %909 = vmatprep.subr.mxu0 0.0
        %910 = vmatpush1.msra.mxu0 0.0
        %911 = vmatprep.subr.mxu0 0.0
        %912 = vmatpush1.msra.mxu0 0.0
        %913 = vmatprep.subr.mxu0 0.0
        %914 = vmatpush1.msra.mxu0 0.0
        %915 = vmatprep.subr.mxu0 0.0
        %916 = vmatpush1.msra.mxu0 0.0
        %917 = vmatprep.subr.mxu0 0.0
        %918 = vmatpush1.msra.mxu0 0.0
        %919 = vmatprep.subr.mxu0 0.0
        %920 = vmatpush1.msra.mxu0 0.0
        %921 = vmatprep.mubr.f32.mxu0 0.0
        %922 = vmatmul.mubr.f32.gmra.mrb[0].mxu0 %v762
        %v923 = vpop.f32.mrb[0].mxu0
        %v924 = vadd.f32 0.0, %v923
        %v925 = vpop.f32.mrb[0].mxu0
        %926 = vmatprep.mubr.f32.mxu0 0.0
        %927 = vmatmul.mubr.f32.gmra.mrb[0].mxu0 %v765
        %v928 = vpop.f32.mrb[0].mxu0
        %v929 = vadd.f32 0.0, %v928
        %v930 = vpop.f32.mrb[0].mxu0
        %931 = vmatprep.mubr.f32.mxu0 0.0
        %932 = vmatmul.mubr.f32.gmra.mrb[0].mxu0 %v768
        %v933 = vpop.f32.mrb[0].mxu0
        %v934 = vadd.f32 0.0, %v933
        %v935 = vpop.f32.mrb[0].mxu0
        %936 = vmatprep.mubr.f32.mxu0 0.0
        %937 = vmatmul.mubr.f32.gmra.mrb[0].mxu0 %v771
        %v938 = vpop.f32.mrb[0].mxu0
        %v939 = vadd.f32 0.0, %v938
        %v940 = vpop.f32.mrb[0].mxu0
        %941 = vmatprep.mubr.f32.mxu0 0.0
        %942 = vmatmul.mubr.f32.gmra.mrb[0].mxu0 %v774
        %v943 = vpop.f32.mrb[0].mxu0
        %v944 = vadd.f32 0.0, %v943
        %v945 = vpop.f32.mrb[0].mxu0
        %946 = vmatprep.mubr.f32.mxu0 0.0
        %947 = vmatmul.mubr.f32.gmra.mrb[0].mxu0 %v777
        %v948 = vpop.f32.mrb[0].mxu0
        %v949 = vadd.f32 0.0, %v948
        %v950 = vpop.f32.mrb[0].mxu0
        %951 = vmatprep.mubr.f32.mxu0 0.0
        %952 = vmatmul.mubr.f32.gmra.mrb[0].mxu0 %v780
        %v953 = vpop.f32.mrb[0].mxu0
        %v954 = vadd.f32 0.0, %v953
        %v955 = vpop.f32.mrb[0].mxu0
        %956 = vmatprep.mubr.f32.mxu0 0.0
        %957 = vmatmul.mubr.f32.gmra.mrb[0].mxu0 %v783
        %v958 = vpop.f32.mrb[0].mxu0
        %v959 = vadd.f32 0.0, %v958
        %v960 = vpop.f32.mrb[0].mxu0
        %961 = vmatprep.mubr.f32.mxu0 0.0
        %962 = vmatmul.mubr.f32.gmra.mrb[0].mxu0 %v786
        %v963 = vpop.f32.mrb[0].mxu0
        %v964 = vadd.f32 0.0, %v963
        %v965 = vpop.f32.mrb[0].mxu0
        %966 = vmatprep.mubr.f32.mxu0 0.0
        %967 = vmatmul.mubr.f32.gmra.mrb[0].mxu0 %v789
        %v968 = vpop.f32.mrb[0].mxu0
        %v969 = vadd.f32 0.0, %v968
        %v970 = vpop.f32.mrb[0].mxu0
        %971 = vmatprep.mubr.f32.mxu0 0.0
        %972 = vmatmul.mubr.f32.gmra.mrb[0].mxu0 %v792
        %v973 = vpop.f32.mrb[0].mxu0
        %v974 = vadd.f32 0.0, %v973
        %v975 = vpop.f32.mrb[0].mxu0
        %976 = vmatprep.mubr.f32.mxu0 0.0
        %977 = vmatmul.mubr.f32.gmra.mrb[0].mxu0 %v795
        %v978 = vpop.f32.mrb[0].mxu0
        %v979 = vadd.f32 0.0, %v978
        %v980 = vpop.f32.mrb[0].mxu0
        %981 = vmatprep.mubr.f32.mxu0 0.0
        %982 = vmatmul.mubr.f32.gmra.mrb[0].mxu0 %v798
        %v983 = vpop.f32.mrb[0].mxu0
        %v984 = vadd.f32 0.0, %v983
        %v985 = vpop.f32.mrb[0].mxu0
        %986 = vmatprep.mubr.f32.mxu0 0.0
        %987 = vmatmul.mubr.f32.gmra.mrb[0].mxu0 %v801
        %v988 = vpop.f32.mrb[0].mxu0
        %v989 = vadd.f32 0.0, %v988
        %v990 = vpop.f32.mrb[0].mxu0
        %991 = vmatprep.mubr.f32.mxu0 0.0
        %992 = vmatmul.mubr.f32.gmra.mrb[0].mxu0 %v804
        %v993 = vpop.f32.mrb[0].mxu0
        %v994 = vadd.f32 0.0, %v993
        %v995 = vpop.f32.mrb[0].mxu0
        %996 = vmatprep.mubr.f32.mxu0 0.0
        %997 = vmatmul.mubr.f32.gmra.mrb[0].mxu0 %v807
        %v998 = vpop.f32.mrb[0].mxu0
        %v999 = vadd.f32 0.0, %v998
        %v1000 = vpop.f32.mrb[0].mxu0
        %1001 = vmatprep.mubr.f32.mxu0 0.0
        %1002 = vmatmul.mubr.f32.gmra.mrb[0].mxu0 %v810
        %v1003 = vpop.f32.mrb[0].mxu0
        %v1004 = vadd.f32 0.0, %v1003
        %v1005 = vpop.f32.mrb[0].mxu0
        %1006 = vmatprep.mubr.f32.mxu0 0.0
        %1007 = vmatmul.mubr.f32.gmra.mrb[0].mxu0 %v813
        %v1008 = vpop.f32.mrb[0].mxu0
        %v1009 = vadd.f32 0.0, %v1008
        %v1010 = vpop.f32.mrb[0].mxu0
        %1011 = vmatprep.mubr.f32.mxu0 0.0
        %1012 = vmatmul.mubr.f32.gmra.mrb[0].mxu0 %v816
        %v1013 = vpop.f32.mrb[0].mxu0
        %v1014 = vadd.f32 0.0, %v1013
        %v1015 = vpop.f32.mrb[0].mxu0
        %1016 = vmatprep.mubr.f32.mxu0 0.0
        %1017 = vmatmul.mubr.f32.gmra.mrb[0].mxu0 %v819
        %v1018 = vpop.f32.mrb[0].mxu0
        %v1019 = vadd.f32 0.0, %v1018
        %v1020 = vpop.f32.mrb[0].mxu0
        %1021 = vmatprep.mubr.f32.mxu0 0.0
        %1022 = vmatmul.mubr.f32.gmra.mrb[0].mxu0 %v822
        %v1023 = vpop.f32.mrb[0].mxu0
        %v1024 = vadd.f32 0.0, %v1023
        %v1025 = vpop.f32.mrb[0].mxu0
        %1026 = vmatprep.mubr.f32.mxu0 0.0
        %1027 = vmatmul.mubr.f32.gmra.mrb[0].mxu0 %v825
        %v1028 = vpop.f32.mrb[0].mxu0
        %v1029 = vadd.f32 0.0, %v1028
        %v1030 = vpop.f32.mrb[0].mxu0
        %1031 = vmatprep.mubr.f32.mxu0 0.0
        %1032 = vmatmul.mubr.f32.gmra.mrb[0].mxu0 %v828
        %v1033 = vpop.f32.mrb[0].mxu0
        %v1034 = vadd.f32 0.0, %v1033
        %v1035 = vpop.f32.mrb[0].mxu0
        %1036 = vmatprep.mubr.f32.mxu0 0.0
        %1037 = vmatmul.mubr.f32.gmra.mrb[0].mxu0 %v831
        %v1038 = vpop.f32.mrb[0].mxu0
        %v1039 = vadd.f32 0.0, %v1038
        %v1040 = vpop.f32.mrb[0].mxu0
        %1041 = vmatprep.mubr.f32.mxu0 0.0
        %1042 = vmatmul.mubr.f32.gmra.mrb[0].mxu0 %v834
        %v1043 = vpop.f32.mrb[0].mxu0
        %v1044 = vadd.f32 0.0, %v1043
        %v1045 = vpop.f32.mrb[0].mxu0
        %1046 = vmatprep.mubr.f32.mxu0 0.0
        %1047 = vmatmul.mubr.f32.gmra.mrb[0].mxu0 %v837
        %v1048 = vpop.f32.mrb[0].mxu0
        %v1049 = vadd.f32 0.0, %v1048
        %v1050 = vpop.f32.mrb[0].mxu0
        %1051 = vmatprep.mubr.f32.mxu0 0.0
        %1052 = vmatmul.mubr.f32.gmra.mrb[0].mxu0 %v840
        %v1053 = vpop.f32.mrb[0].mxu0
        %v1054 = vadd.f32 0.0, %v1053
        %v1055 = vpop.f32.mrb[0].mxu0
        %1056 = vmatprep.mubr.f32.mxu0 0.0
        %1057 = vmatmul.mubr.f32.gmra.mrb[0].mxu0 %v843
        %v1058 = vpop.f32.mrb[0].mxu0
        %v1059 = vadd.f32 0.0, %v1058
        %v1060 = vpop.f32.mrb[0].mxu0
        %1061 = vmatprep.mubr.f32.mxu0 0.0
        %1062 = vmatmul.mubr.f32.gmra.mrb[0].mxu0 %v846
        %v1063 = vpop.f32.mrb[0].mxu0
        %v1064 = vadd.f32 0.0, %v1063
        %v1065 = vpop.f32.mrb[0].mxu0
        %1066 = vmatprep.mubr.f32.mxu0 0.0
        %1067 = vmatmul.mubr.f32.gmra.mrb[0].mxu0 %v849
        %v1068 = vpop.f32.mrb[0].mxu0
        %v1069 = vadd.f32 0.0, %v1068
        %v1070 = vpop.f32.mrb[0].mxu0
        %1071 = vmatprep.mubr.f32.mxu0 0.0
        %1072 = vmatmul.mubr.f32.gmra.mrb[0].mxu0 %v852
        %v1073 = vpop.f32.mrb[0].mxu0
        %v1074 = vadd.f32 0.0, %v1073
        %v1075 = vpop.f32.mrb[0].mxu0
        %1076 = vmatprep.mubr.f32.mxu0 0.0
        %1077 = vmatmul.mubr.f32.gmra.mrb[0].mxu0 %v855
        %v1078 = vpop.f32.mrb[0].mxu0
        %v1079 = vadd.f32 0.0, %v1078
        %v1080 = vpop.f32.mrb[0].mxu0
        %1081 = vdwg.mxu0
        %v1082 = vld [vmem:[%s4] sm:$0xff]
        %v1083 = vld [vmem:[%s4 + $0x8] sm:$0xff]
        %v1084 = vld [vmem:[%s4 + $0x10] sm:$0xff]
        %v1085 = vld [vmem:[%s4 + $0x18] sm:$0xff]
        %v1086 = vld [vmem:[%s5] sm:$0x1]
        %v1088 = vlaneseq
        %v1089 = vshrl.u32 %v1088, 7
        %v1090 = vsub.s32 0, %v1089
        %v1091 = vrot.slane %v1086, %v1090
        %vm1093 = vcmask 261120
        %v1095 = vsel %vm1093, %v599, 0
        %v1098 = vsel %vm1093, %v600, 0
        %v1101 = vsel %vm1093, %v601, 0
        %v1104 = vsel %vm1093, %v602, 0
        %v1107 = vsel %vm1093, %v603, 0
        %v1110 = vsel %vm1093, %v604, 0
        %v1113 = vsel %vm1093, %v605, 0
        %v1116 = vsel %vm1093, %v606, 0
        %v1119 = vsel %vm1093, %v607, 0
        %v1122 = vsel %vm1093, %v608, 0
        %v1125 = vsel %vm1093, %v609, 0
        %v1128 = vsel %vm1093, %v610, 0
        %v1131 = vsel %vm1093, %v611, 0
        %v1134 = vsel %vm1093, %v612, 0
        %v1137 = vsel %vm1093, %v613, 0
        %v1140 = vsel %vm1093, %v614, 0
        %v1143 = vsel %vm1093, %v615, 0
        %v1146 = vsel %vm1093, %v616, 0
        %v1149 = vsel %vm1093, %v617, 0
        %v1152 = vsel %vm1093, %v618, 0
        %v1155 = vsel %vm1093, %v619, 0
        %v1158 = vsel %vm1093, %v620, 0
        %v1161 = vsel %vm1093, %v621, 0
        %v1164 = vsel %vm1093, %v622, 0
        %v1167 = vsel %vm1093, %v623, 0
        %v1170 = vsel %vm1093, %v624, 0
        %v1173 = vsel %vm1093, %v625, 0
        %v1176 = vsel %vm1093, %v626, 0
        %v1179 = vsel %vm1093, %v627, 0
        %v1182 = vsel %vm1093, %v628, 0
        %v1185 = vsel %vm1093, %v629, 0
        %v1188 = vsel %vm1093, %v630, 0
        %1190 = vmatprep.subr.mxu0 0.0
        %1191 = vmatpush1.msra.mxu0 %v1082
        %1192 = vmatprep.subr.mxu0 0.0
        %1193 = vmatpush1.msra.mxu0 %v1083
        %1194 = vmatprep.subr.mxu0 0.0
        %1195 = vmatpush1.msra.mxu0 %v1084
        %1196 = vmatprep.subr.mxu0 0.0
        %1197 = vmatpush1.msra.mxu0 %v1085
        %1198 = vmatprep.subr.mxu0 0.0
        %1199 = vmatpush1.msra.mxu0 0.0
        %1200 = vmatprep.subr.mxu0 0.0
        %1201 = vmatpush1.msra.mxu0 0.0
        %1202 = vmatprep.subr.mxu0 0.0
        %1203 = vmatpush1.msra.mxu0 0.0
        %1204 = vmatprep.subr.mxu0 0.0
        %1205 = vmatpush1.msra.mxu0 0.0
        %1206 = vmatprep.subr.mxu0 0.0
        %1207 = vmatpush1.msra.mxu0 0.0
        %1208 = vmatprep.subr.mxu0 0.0
        %1209 = vmatpush1.msra.mxu0 0.0
        %1210 = vmatprep.subr.mxu0 0.0
        %1211 = vmatpush1.msra.mxu0 0.0
        %1212 = vmatprep.subr.mxu0 0.0
        %1213 = vmatpush1.msra.mxu0 0.0
        %1214 = vmatprep.subr.mxu0 0.0
        %1215 = vmatpush1.msra.mxu0 0.0
        %1216 = vmatprep.subr.mxu0 0.0
        %1217 = vmatpush1.msra.mxu0 0.0
        %1218 = vmatprep.subr.mxu0 0.0
        %1219 = vmatpush1.msra.mxu0 0.0
        %1220 = vmatprep.subr.mxu0 0.0
        %1221 = vmatpush1.msra.mxu0 0.0
        %1222 = vmatprep.subr.mxu0 0.0
        %1223 = vmatpush1.msra.mxu0 0.0
        %1224 = vmatprep.subr.mxu0 0.0
        %1225 = vmatpush1.msra.mxu0 0.0
        %1226 = vmatprep.subr.mxu0 0.0
        %1227 = vmatpush1.msra.mxu0 0.0
        %1228 = vmatprep.subr.mxu0 0.0
        %1229 = vmatpush1.msra.mxu0 0.0
        %1230 = vmatprep.subr.mxu0 0.0
        %1231 = vmatpush1.msra.mxu0 0.0
        %1232 = vmatprep.subr.mxu0 0.0
        %1233 = vmatpush1.msra.mxu0 0.0
        %1234 = vmatprep.subr.mxu0 0.0
        %1235 = vmatpush1.msra.mxu0 0.0
        %1236 = vmatprep.subr.mxu0 0.0
        %1237 = vmatpush1.msra.mxu0 0.0
        %1238 = vmatprep.subr.mxu0 0.0
        %1239 = vmatpush1.msra.mxu0 0.0
        %1240 = vmatprep.subr.mxu0 0.0
        %1241 = vmatpush1.msra.mxu0 0.0
        %1242 = vmatprep.subr.mxu0 0.0
        %1243 = vmatpush1.msra.mxu0 0.0
        %1244 = vmatprep.subr.mxu0 0.0
        %1245 = vmatpush1.msra.mxu0 0.0
        %1246 = vmatprep.subr.mxu0 0.0
        %1247 = vmatpush1.msra.mxu0 0.0
        %1248 = vmatprep.subr.mxu0 0.0
        %1249 = vmatpush1.msra.mxu0 0.0
        %1250 = vmatprep.subr.mxu0 0.0
        %1251 = vmatpush1.msra.mxu0 0.0
        %1252 = vmatprep.subr.mxu0 0.0
        %1253 = vmatpush1.msra.mxu0 0.0
        %1254 = vmatprep.mubr.f32.mxu0 0.0
        %1255 = vmatmul.mubr.f32.gmra.mrb[0].mxu0 %v1095
        %v1256 = vpop.f32.mrb[0].mxu0
        %v1257 = vadd.f32 %v1091, %v1256
        %v1258 = vpop.f32.mrb[0].mxu0
        %1259 = vmatprep.mubr.f32.mxu0 0.0
        %1260 = vmatmul.mubr.f32.gmra.mrb[0].mxu0 %v1098
        %v1261 = vpop.f32.mrb[0].mxu0
        %v1262 = vadd.f32 %v1091, %v1261
        %v1263 = vpop.f32.mrb[0].mxu0
        %1264 = vmatprep.mubr.f32.mxu0 0.0
        %1265 = vmatmul.mubr.f32.gmra.mrb[0].mxu0 %v1101
        %v1266 = vpop.f32.mrb[0].mxu0
        %v1267 = vadd.f32 %v1091, %v1266
        %v1268 = vpop.f32.mrb[0].mxu0
        %1269 = vmatprep.mubr.f32.mxu0 0.0
        %1270 = vmatmul.mubr.f32.gmra.mrb[0].mxu0 %v1104
        %v1271 = vpop.f32.mrb[0].mxu0
        %v1272 = vadd.f32 %v1091, %v1271
        %v1273 = vpop.f32.mrb[0].mxu0
        %1274 = vmatprep.mubr.f32.mxu0 0.0
        %1275 = vmatmul.mubr.f32.gmra.mrb[0].mxu0 %v1107
        %v1276 = vpop.f32.mrb[0].mxu0
        %v1277 = vadd.f32 %v1091, %v1276
        %v1278 = vpop.f32.mrb[0].mxu0
        %1279 = vmatprep.mubr.f32.mxu0 0.0
        %1280 = vmatmul.mubr.f32.gmra.mrb[0].mxu0 %v1110
        %v1281 = vpop.f32.mrb[0].mxu0
        %v1282 = vadd.f32 %v1091, %v1281
        %v1283 = vpop.f32.mrb[0].mxu0
        %1284 = vmatprep.mubr.f32.mxu0 0.0
        %1285 = vmatmul.mubr.f32.gmra.mrb[0].mxu0 %v1113
        %v1286 = vpop.f32.mrb[0].mxu0
        %v1287 = vadd.f32 %v1091, %v1286
        %v1288 = vpop.f32.mrb[0].mxu0
        %1289 = vmatprep.mubr.f32.mxu0 0.0
        %1290 = vmatmul.mubr.f32.gmra.mrb[0].mxu0 %v1116
        %v1291 = vpop.f32.mrb[0].mxu0
        %v1292 = vadd.f32 %v1091, %v1291
        %v1293 = vpop.f32.mrb[0].mxu0
        %1294 = vmatprep.mubr.f32.mxu0 0.0
        %1295 = vmatmul.mubr.f32.gmra.mrb[0].mxu0 %v1119
        %v1296 = vpop.f32.mrb[0].mxu0
        %v1297 = vadd.f32 %v1091, %v1296
        %v1298 = vpop.f32.mrb[0].mxu0
        %1299 = vmatprep.mubr.f32.mxu0 0.0
        %1300 = vmatmul.mubr.f32.gmra.mrb[0].mxu0 %v1122
        %v1301 = vpop.f32.mrb[0].mxu0
        %v1302 = vadd.f32 %v1091, %v1301
        %v1303 = vpop.f32.mrb[0].mxu0
        %1304 = vmatprep.mubr.f32.mxu0 0.0
        %1305 = vmatmul.mubr.f32.gmra.mrb[0].mxu0 %v1125
        %v1306 = vpop.f32.mrb[0].mxu0
        %v1307 = vadd.f32 %v1091, %v1306
        %v1308 = vpop.f32.mrb[0].mxu0
        %1309 = vmatprep.mubr.f32.mxu0 0.0
        %1310 = vmatmul.mubr.f32.gmra.mrb[0].mxu0 %v1128
        %v1311 = vpop.f32.mrb[0].mxu0
        %v1312 = vadd.f32 %v1091, %v1311
        %v1313 = vpop.f32.mrb[0].mxu0
        %1314 = vmatprep.mubr.f32.mxu0 0.0
        %1315 = vmatmul.mubr.f32.gmra.mrb[0].mxu0 %v1131
        %v1316 = vpop.f32.mrb[0].mxu0
        %v1317 = vadd.f32 %v1091, %v1316
        %v1318 = vpop.f32.mrb[0].mxu0
        %1319 = vmatprep.mubr.f32.mxu0 0.0
        %1320 = vmatmul.mubr.f32.gmra.mrb[0].mxu0 %v1134
        %v1321 = vpop.f32.mrb[0].mxu0
        %v1322 = vadd.f32 %v1091, %v1321
        %v1323 = vpop.f32.mrb[0].mxu0
        %1324 = vmatprep.mubr.f32.mxu0 0.0
        %1325 = vmatmul.mubr.f32.gmra.mrb[0].mxu0 %v1137
        %v1326 = vpop.f32.mrb[0].mxu0
        %v1327 = vadd.f32 %v1091, %v1326
        %v1328 = vpop.f32.mrb[0].mxu0
        %1329 = vmatprep.mubr.f32.mxu0 0.0
        %1330 = vmatmul.mubr.f32.gmra.mrb[0].mxu0 %v1140
        %v1331 = vpop.f32.mrb[0].mxu0
        %v1332 = vadd.f32 %v1091, %v1331
        %v1333 = vpop.f32.mrb[0].mxu0
        %1334 = vmatprep.mubr.f32.mxu0 0.0
        %1335 = vmatmul.mubr.f32.gmra.mrb[0].mxu0 %v1143
        %v1336 = vpop.f32.mrb[0].mxu0
        %v1337 = vadd.f32 %v1091, %v1336
        %v1338 = vpop.f32.mrb[0].mxu0
        %1339 = vmatprep.mubr.f32.mxu0 0.0
        %1340 = vmatmul.mubr.f32.gmra.mrb[0].mxu0 %v1146
        %v1341 = vpop.f32.mrb[0].mxu0
        %v1342 = vadd.f32 %v1091, %v1341
        %v1343 = vpop.f32.mrb[0].mxu0
        %1344 = vmatprep.mubr.f32.mxu0 0.0
        %1345 = vmatmul.mubr.f32.gmra.mrb[0].mxu0 %v1149
        %v1346 = vpop.f32.mrb[0].mxu0
        %v1347 = vadd.f32 %v1091, %v1346
        %v1348 = vpop.f32.mrb[0].mxu0
        %1349 = vmatprep.mubr.f32.mxu0 0.0
        %1350 = vmatmul.mubr.f32.gmra.mrb[0].mxu0 %v1152
        %v1351 = vpop.f32.mrb[0].mxu0
        %v1352 = vadd.f32 %v1091, %v1351
        %v1353 = vpop.f32.mrb[0].mxu0
        %1354 = vmatprep.mubr.f32.mxu0 0.0
        %1355 = vmatmul.mubr.f32.gmra.mrb[0].mxu0 %v1155
        %v1356 = vpop.f32.mrb[0].mxu0
        %v1357 = vadd.f32 %v1091, %v1356
        %v1358 = vpop.f32.mrb[0].mxu0
        %1359 = vmatprep.mubr.f32.mxu0 0.0
        %1360 = vmatmul.mubr.f32.gmra.mrb[0].mxu0 %v1158
        %v1361 = vpop.f32.mrb[0].mxu0
        %v1362 = vadd.f32 %v1091, %v1361
        %v1363 = vpop.f32.mrb[0].mxu0
        %1364 = vmatprep.mubr.f32.mxu0 0.0
        %1365 = vmatmul.mubr.f32.gmra.mrb[0].mxu0 %v1161
        %v1366 = vpop.f32.mrb[0].mxu0
        %v1367 = vadd.f32 %v1091, %v1366
        %v1368 = vpop.f32.mrb[0].mxu0
        %1369 = vmatprep.mubr.f32.mxu0 0.0
        %1370 = vmatmul.mubr.f32.gmra.mrb[0].mxu0 %v1164
        %v1371 = vpop.f32.mrb[0].mxu0
        %v1372 = vadd.f32 %v1091, %v1371
        %v1373 = vpop.f32.mrb[0].mxu0
        %1374 = vmatprep.mubr.f32.mxu0 0.0
        %1375 = vmatmul.mubr.f32.gmra.mrb[0].mxu0 %v1167
        %v1376 = vpop.f32.mrb[0].mxu0
        %v1377 = vadd.f32 %v1091, %v1376
        %v1378 = vpop.f32.mrb[0].mxu0
        %1379 = vmatprep.mubr.f32.mxu0 0.0
        %1380 = vmatmul.mubr.f32.gmra.mrb[0].mxu0 %v1170
        %v1381 = vpop.f32.mrb[0].mxu0
        %v1382 = vadd.f32 %v1091, %v1381
        %v1383 = vpop.f32.mrb[0].mxu0
        %1384 = vmatprep.mubr.f32.mxu0 0.0
        %1385 = vmatmul.mubr.f32.gmra.mrb[0].mxu0 %v1173
        %v1386 = vpop.f32.mrb[0].mxu0
        %v1387 = vadd.f32 %v1091, %v1386
        %v1388 = vpop.f32.mrb[0].mxu0
        %1389 = vmatprep.mubr.f32.mxu0 0.0
        %1390 = vmatmul.mubr.f32.gmra.mrb[0].mxu0 %v1176
        %v1391 = vpop.f32.mrb[0].mxu0
        %v1392 = vadd.f32 %v1091, %v1391
        %v1393 = vpop.f32.mrb[0].mxu0
        %1394 = vmatprep.mubr.f32.mxu0 0.0
        %1395 = vmatmul.mubr.f32.gmra.mrb[0].mxu0 %v1179
        %v1396 = vpop.f32.mrb[0].mxu0
        %v1397 = vadd.f32 %v1091, %v1396
        %v1398 = vpop.f32.mrb[0].mxu0
        %1399 = vmatprep.mubr.f32.mxu0 0.0
        %1400 = vmatmul.mubr.f32.gmra.mrb[0].mxu0 %v1182
        %v1401 = vpop.f32.mrb[0].mxu0
        %v1402 = vadd.f32 %v1091, %v1401
        %v1403 = vpop.f32.mrb[0].mxu0
        %1404 = vmatprep.mubr.f32.mxu0 0.0
        %1405 = vmatmul.mubr.f32.gmra.mrb[0].mxu0 %v1185
        %v1406 = vpop.f32.mrb[0].mxu0
        %v1407 = vadd.f32 %v1091, %v1406
        %v1408 = vpop.f32.mrb[0].mxu0
        %1409 = vmatprep.mubr.f32.mxu0 0.0
        %1410 = vmatmul.mubr.f32.gmra.mrb[0].mxu0 %v1188
        %v1411 = vpop.f32.mrb[0].mxu0
        %v1412 = vadd.f32 %v1091, %v1411
        %v1413 = vpop.f32.mrb[0].mxu0
        %1414 = vdwg.mxu0
        %v1415 = vmax.f32 %v1257, 0.0
        %v1416 = vmax.f32 %v1262, 0.0
        %v1417 = vmax.f32 %v1267, 0.0
        %v1418 = vmax.f32 %v1272, 0.0
        %v1419 = vmax.f32 %v1277, 0.0
        %v1420 = vmax.f32 %v1282, 0.0
        %v1421 = vmax.f32 %v1287, 0.0
        %v1422 = vmax.f32 %v1292, 0.0
        %v1423 = vmax.f32 %v1297, 0.0
        %v1424 = vmax.f32 %v1302, 0.0
        %v1425 = vmax.f32 %v1307, 0.0
        %v1426 = vmax.f32 %v1312, 0.0
        %v1427 = vmax.f32 %v1317, 0.0
        %v1428 = vmax.f32 %v1322, 0.0
        %v1429 = vmax.f32 %v1327, 0.0
        %v1430 = vmax.f32 %v1332, 0.0
        %v1431 = vmax.f32 %v1337, 0.0
        %v1432 = vmax.f32 %v1342, 0.0
        %v1433 = vmax.f32 %v1347, 0.0
        %v1434 = vmax.f32 %v1352, 0.0
        %v1435 = vmax.f32 %v1357, 0.0
        %v1436 = vmax.f32 %v1362, 0.0
        %v1437 = vmax.f32 %v1367, 0.0
        %v1438 = vmax.f32 %v1372, 0.0
        %v1439 = vmax.f32 %v1377, 0.0
        %v1440 = vmax.f32 %v1382, 0.0
        %v1441 = vmax.f32 %v1387, 0.0
        %v1442 = vmax.f32 %v1392, 0.0
        %v1443 = vmax.f32 %v1397, 0.0
        %v1444 = vmax.f32 %v1402, 0.0
        %v1445 = vmax.f32 %v1407, 0.0
        %v1446 = vmax.f32 %v1412, 0.0
        %v1447 = vld [vmem:[%s6] sm:$0xff]
        %v1448 = vld [vmem:[%s6 + $0x8] sm:$0xff]
        %v1449 = vld [vmem:[%s6 + $0x10] sm:$0xff]
        %v1450 = vld [vmem:[%s6 + $0x18] sm:$0xff]
        %v1451 = vld [vmem:[%s7] sm:$0x1]
        %v1453 = vlaneseq
        %v1454 = vshrl.u32 %v1453, 7
        %v1455 = vsub.s32 0, %v1454
        %v1456 = vrot.slane %v1451, %v1455
        %v1459 = vsel %vm1093, %v1415, 0
        %v1462 = vsel %vm1093, %v1416, 0
        %v1465 = vsel %vm1093, %v1417, 0
        %v1468 = vsel %vm1093, %v1418, 0
        %v1471 = vsel %vm1093, %v1419, 0
        %v1474 = vsel %vm1093, %v1420, 0
        %v1477 = vsel %vm1093, %v1421, 0
        %v1480 = vsel %vm1093, %v1422, 0
        %v1483 = vsel %vm1093, %v1423, 0
        %v1486 = vsel %vm1093, %v1424, 0
        %v1489 = vsel %vm1093, %v1425, 0
        %v1492 = vsel %vm1093, %v1426, 0
        %v1495 = vsel %vm1093, %v1427, 0
        %v1498 = vsel %vm1093, %v1428, 0
        %v1501 = vsel %vm1093, %v1429, 0
        %v1504 = vsel %vm1093, %v1430, 0
        %v1507 = vsel %vm1093, %v1431, 0
        %v1510 = vsel %vm1093, %v1432, 0
        %v1513 = vsel %vm1093, %v1433, 0
        %v1516 = vsel %vm1093, %v1434, 0
        %v1519 = vsel %vm1093, %v1435, 0
        %v1522 = vsel %vm1093, %v1436, 0
        %v1525 = vsel %vm1093, %v1437, 0
        %v1528 = vsel %vm1093, %v1438, 0
        %v1531 = vsel %vm1093, %v1439, 0
        %v1534 = vsel %vm1093, %v1440, 0
        %v1537 = vsel %vm1093, %v1441, 0
        %v1540 = vsel %vm1093, %v1442, 0
        %v1543 = vsel %vm1093, %v1443, 0
        %v1546 = vsel %vm1093, %v1444, 0
        %v1549 = vsel %vm1093, %v1445, 0
        %v1552 = vsel %vm1093, %v1446, 0
        %1554 = vmatprep.subr.mxu0 0.0
        %1555 = vmatpush1.msra.mxu0 %v1447
        %1556 = vmatprep.subr.mxu0 0.0
        %1557 = vmatpush1.msra.mxu0 %v1448
        %1558 = vmatprep.subr.mxu0 0.0
        %1559 = vmatpush1.msra.mxu0 %v1449
        %1560 = vmatprep.subr.mxu0 0.0
        %1561 = vmatpush1.msra.mxu0 %v1450
        %1562 = vmatprep.subr.mxu0 0.0
        %1563 = vmatpush1.msra.mxu0 0.0
        %1564 = vmatprep.subr.mxu0 0.0
        %1565 = vmatpush1.msra.mxu0 0.0
        %1566 = vmatprep.subr.mxu0 0.0
        %1567 = vmatpush1.msra.mxu0 0.0
        %1568 = vmatprep.subr.mxu0 0.0
        %1569 = vmatpush1.msra.mxu0 0.0
        %1570 = vmatprep.subr.mxu0 0.0
        %1571 = vmatpush1.msra.mxu0 0.0
        %1572 = vmatprep.subr.mxu0 0.0
        %1573 = vmatpush1.msra.mxu0 0.0
        %1574 = vmatprep.subr.mxu0 0.0
        %1575 = vmatpush1.msra.mxu0 0.0
        %1576 = vmatprep.subr.mxu0 0.0
        %1577 = vmatpush1.msra.mxu0 0.0
        %1578 = vmatprep.subr.mxu0 0.0
        %1579 = vmatpush1.msra.mxu0 0.0
        %1580 = vmatprep.subr.mxu0 0.0
        %1581 = vmatpush1.msra.mxu0 0.0
        %1582 = vmatprep.subr.mxu0 0.0
        %1583 = vmatpush1.msra.mxu0 0.0
        %1584 = vmatprep.subr.mxu0 0.0
        %1585 = vmatpush1.msra.mxu0 0.0
        %1586 = vmatprep.subr.mxu0 0.0
        %1587 = vmatpush1.msra.mxu0 0.0
        %1588 = vmatprep.subr.mxu0 0.0
        %1589 = vmatpush1.msra.mxu0 0.0
        %1590 = vmatprep.subr.mxu0 0.0
        %1591 = vmatpush1.msra.mxu0 0.0
        %1592 = vmatprep.subr.mxu0 0.0
        %1593 = vmatpush1.msra.mxu0 0.0
        %1594 = vmatprep.subr.mxu0 0.0
        %1595 = vmatpush1.msra.mxu0 0.0
        %1596 = vmatprep.subr.mxu0 0.0
        %1597 = vmatpush1.msra.mxu0 0.0
        %1598 = vmatprep.subr.mxu0 0.0
        %1599 = vmatpush1.msra.mxu0 0.0
        %1600 = vmatprep.subr.mxu0 0.0
        %1601 = vmatpush1.msra.mxu0 0.0
        %1602 = vmatprep.subr.mxu0 0.0
        %1603 = vmatpush1.msra.mxu0 0.0
        %1604 = vmatprep.subr.mxu0 0.0
        %1605 = vmatpush1.msra.mxu0 0.0
        %1606 = vmatprep.subr.mxu0 0.0
        %1607 = vmatpush1.msra.mxu0 0.0
        %1608 = vmatprep.subr.mxu0 0.0
        %1609 = vmatpush1.msra.mxu0 0.0
        %1610 = vmatprep.subr.mxu0 0.0
        %1611 = vmatpush1.msra.mxu0 0.0
        %1612 = vmatprep.subr.mxu0 0.0
        %1613 = vmatpush1.msra.mxu0 0.0
        %1614 = vmatprep.subr.mxu0 0.0
        %1615 = vmatpush1.msra.mxu0 0.0
        %1616 = vmatprep.subr.mxu0 0.0
        %1617 = vmatpush1.msra.mxu0 0.0
        %1618 = vmatprep.mubr.f32.mxu0 0.0
        %1619 = vmatmul.mubr.f32.gmra.mrb[0].mxu0 %v1459
        %v1620 = vpop.f32.mrb[0].mxu0
        %v1621 = vadd.f32 %v1456, %v1620
        %v1622 = vpop.f32.mrb[0].mxu0
        %1623 = vmatprep.mubr.f32.mxu0 0.0
        %1624 = vmatmul.mubr.f32.gmra.mrb[0].mxu0 %v1462
        %v1625 = vpop.f32.mrb[0].mxu0
        %v1626 = vadd.f32 %v1456, %v1625
        %v1627 = vpop.f32.mrb[0].mxu0
        %1628 = vmatprep.mubr.f32.mxu0 0.0
        %1629 = vmatmul.mubr.f32.gmra.mrb[0].mxu0 %v1465
        %v1630 = vpop.f32.mrb[0].mxu0
        %v1631 = vadd.f32 %v1456, %v1630
        %v1632 = vpop.f32.mrb[0].mxu0
        %1633 = vmatprep.mubr.f32.mxu0 0.0
        %1634 = vmatmul.mubr.f32.gmra.mrb[0].mxu0 %v1468
        %v1635 = vpop.f32.mrb[0].mxu0
        %v1636 = vadd.f32 %v1456, %v1635
        %v1637 = vpop.f32.mrb[0].mxu0
        %1638 = vmatprep.mubr.f32.mxu0 0.0
        %1639 = vmatmul.mubr.f32.gmra.mrb[0].mxu0 %v1471
        %v1640 = vpop.f32.mrb[0].mxu0
        %v1641 = vadd.f32 %v1456, %v1640
        %v1642 = vpop.f32.mrb[0].mxu0
        %1643 = vmatprep.mubr.f32.mxu0 0.0
        %1644 = vmatmul.mubr.f32.gmra.mrb[0].mxu0 %v1474
        %v1645 = vpop.f32.mrb[0].mxu0
        %v1646 = vadd.f32 %v1456, %v1645
        %v1647 = vpop.f32.mrb[0].mxu0
        %1648 = vmatprep.mubr.f32.mxu0 0.0
        %1649 = vmatmul.mubr.f32.gmra.mrb[0].mxu0 %v1477
        %v1650 = vpop.f32.mrb[0].mxu0
        %v1651 = vadd.f32 %v1456, %v1650
        %v1652 = vpop.f32.mrb[0].mxu0
        %1653 = vmatprep.mubr.f32.mxu0 0.0
        %1654 = vmatmul.mubr.f32.gmra.mrb[0].mxu0 %v1480
        %v1655 = vpop.f32.mrb[0].mxu0
        %v1656 = vadd.f32 %v1456, %v1655
        %v1657 = vpop.f32.mrb[0].mxu0
        %1658 = vmatprep.mubr.f32.mxu0 0.0
        %1659 = vmatmul.mubr.f32.gmra.mrb[0].mxu0 %v1483
        %v1660 = vpop.f32.mrb[0].mxu0
        %v1661 = vadd.f32 %v1456, %v1660
        %v1662 = vpop.f32.mrb[0].mxu0
        %1663 = vmatprep.mubr.f32.mxu0 0.0
        %1664 = vmatmul.mubr.f32.gmra.mrb[0].mxu0 %v1486
        %v1665 = vpop.f32.mrb[0].mxu0
        %v1666 = vadd.f32 %v1456, %v1665
        %v1667 = vpop.f32.mrb[0].mxu0
        %1668 = vmatprep.mubr.f32.mxu0 0.0
        %1669 = vmatmul.mubr.f32.gmra.mrb[0].mxu0 %v1489
        %v1670 = vpop.f32.mrb[0].mxu0
        %v1671 = vadd.f32 %v1456, %v1670
        %v1672 = vpop.f32.mrb[0].mxu0
        %1673 = vmatprep.mubr.f32.mxu0 0.0
        %1674 = vmatmul.mubr.f32.gmra.mrb[0].mxu0 %v1492
        %v1675 = vpop.f32.mrb[0].mxu0
        %v1676 = vadd.f32 %v1456, %v1675
        %v1677 = vpop.f32.mrb[0].mxu0
        %1678 = vmatprep.mubr.f32.mxu0 0.0
        %1679 = vmatmul.mubr.f32.gmra.mrb[0].mxu0 %v1495
        %v1680 = vpop.f32.mrb[0].mxu0
        %v1681 = vadd.f32 %v1456, %v1680
        %v1682 = vpop.f32.mrb[0].mxu0
        %1683 = vmatprep.mubr.f32.mxu0 0.0
        %1684 = vmatmul.mubr.f32.gmra.mrb[0].mxu0 %v1498
        %v1685 = vpop.f32.mrb[0].mxu0
        %v1686 = vadd.f32 %v1456, %v1685
        %v1687 = vpop.f32.mrb[0].mxu0
        %1688 = vmatprep.mubr.f32.mxu0 0.0
        %1689 = vmatmul.mubr.f32.gmra.mrb[0].mxu0 %v1501
        %v1690 = vpop.f32.mrb[0].mxu0
        %v1691 = vadd.f32 %v1456, %v1690
        %v1692 = vpop.f32.mrb[0].mxu0
        %1693 = vmatprep.mubr.f32.mxu0 0.0
        %1694 = vmatmul.mubr.f32.gmra.mrb[0].mxu0 %v1504
        %v1695 = vpop.f32.mrb[0].mxu0
        %v1696 = vadd.f32 %v1456, %v1695
        %v1697 = vpop.f32.mrb[0].mxu0
        %1698 = vmatprep.mubr.f32.mxu0 0.0
        %1699 = vmatmul.mubr.f32.gmra.mrb[0].mxu0 %v1507
        %v1700 = vpop.f32.mrb[0].mxu0
        %v1701 = vadd.f32 %v1456, %v1700
        %v1702 = vpop.f32.mrb[0].mxu0
        %1703 = vmatprep.mubr.f32.mxu0 0.0
        %1704 = vmatmul.mubr.f32.gmra.mrb[0].mxu0 %v1510
        %v1705 = vpop.f32.mrb[0].mxu0
        %v1706 = vadd.f32 %v1456, %v1705
        %v1707 = vpop.f32.mrb[0].mxu0
        %1708 = vmatprep.mubr.f32.mxu0 0.0
        %1709 = vmatmul.mubr.f32.gmra.mrb[0].mxu0 %v1513
        %v1710 = vpop.f32.mrb[0].mxu0
        %v1711 = vadd.f32 %v1456, %v1710
        %v1712 = vpop.f32.mrb[0].mxu0
        %1713 = vmatprep.mubr.f32.mxu0 0.0
        %1714 = vmatmul.mubr.f32.gmra.mrb[0].mxu0 %v1516
        %v1715 = vpop.f32.mrb[0].mxu0
        %v1716 = vadd.f32 %v1456, %v1715
        %v1717 = vpop.f32.mrb[0].mxu0
        %1718 = vmatprep.mubr.f32.mxu0 0.0
        %1719 = vmatmul.mubr.f32.gmra.mrb[0].mxu0 %v1519
        %v1720 = vpop.f32.mrb[0].mxu0
        %v1721 = vadd.f32 %v1456, %v1720
        %v1722 = vpop.f32.mrb[0].mxu0
        %1723 = vmatprep.mubr.f32.mxu0 0.0
        %1724 = vmatmul.mubr.f32.gmra.mrb[0].mxu0 %v1522
        %v1725 = vpop.f32.mrb[0].mxu0
        %v1726 = vadd.f32 %v1456, %v1725
        %v1727 = vpop.f32.mrb[0].mxu0
        %1728 = vmatprep.mubr.f32.mxu0 0.0
        %1729 = vmatmul.mubr.f32.gmra.mrb[0].mxu0 %v1525
        %v1730 = vpop.f32.mrb[0].mxu0
        %v1731 = vadd.f32 %v1456, %v1730
        %v1732 = vpop.f32.mrb[0].mxu0
        %1733 = vmatprep.mubr.f32.mxu0 0.0
        %1734 = vmatmul.mubr.f32.gmra.mrb[0].mxu0 %v1528
        %v1735 = vpop.f32.mrb[0].mxu0
        %v1736 = vadd.f32 %v1456, %v1735
        %v1737 = vpop.f32.mrb[0].mxu0
        %1738 = vmatprep.mubr.f32.mxu0 0.0
        %1739 = vmatmul.mubr.f32.gmra.mrb[0].mxu0 %v1531
        %v1740 = vpop.f32.mrb[0].mxu0
        %v1741 = vadd.f32 %v1456, %v1740
        %v1742 = vpop.f32.mrb[0].mxu0
        %1743 = vmatprep.mubr.f32.mxu0 0.0
        %1744 = vmatmul.mubr.f32.gmra.mrb[0].mxu0 %v1534
        %v1745 = vpop.f32.mrb[0].mxu0
        %v1746 = vadd.f32 %v1456, %v1745
        %v1747 = vpop.f32.mrb[0].mxu0
        %1748 = vmatprep.mubr.f32.mxu0 0.0
        %1749 = vmatmul.mubr.f32.gmra.mrb[0].mxu0 %v1537
        %v1750 = vpop.f32.mrb[0].mxu0
        %v1751 = vadd.f32 %v1456, %v1750
        %v1752 = vpop.f32.mrb[0].mxu0
        %1753 = vmatprep.mubr.f32.mxu0 0.0
        %1754 = vmatmul.mubr.f32.gmra.mrb[0].mxu0 %v1540
        %v1755 = vpop.f32.mrb[0].mxu0
        %v1756 = vadd.f32 %v1456, %v1755
        %v1757 = vpop.f32.mrb[0].mxu0
        %1758 = vmatprep.mubr.f32.mxu0 0.0
        %1759 = vmatmul.mubr.f32.gmra.mrb[0].mxu0 %v1543
        %v1760 = vpop.f32.mrb[0].mxu0
        %v1761 = vadd.f32 %v1456, %v1760
        %v1762 = vpop.f32.mrb[0].mxu0
        %1763 = vmatprep.mubr.f32.mxu0 0.0
        %1764 = vmatmul.mubr.f32.gmra.mrb[0].mxu0 %v1546
        %v1765 = vpop.f32.mrb[0].mxu0
        %v1766 = vadd.f32 %v1456, %v1765
        %v1767 = vpop.f32.mrb[0].mxu0
        %1768 = vmatprep.mubr.f32.mxu0 0.0
        %1769 = vmatmul.mubr.f32.gmra.mrb[0].mxu0 %v1549
        %v1770 = vpop.f32.mrb[0].mxu0
        %v1771 = vadd.f32 %v1456, %v1770
        %v1772 = vpop.f32.mrb[0].mxu0
        %1773 = vmatprep.mubr.f32.mxu0 0.0
        %1774 = vmatmul.mubr.f32.gmra.mrb[0].mxu0 %v1552
        %v1775 = vpop.f32.mrb[0].mxu0
        %v1776 = vadd.f32 %v1456, %v1775
        %v1777 = vpop.f32.mrb[0].mxu0
        %1778 = vdwg.mxu0
        %v1779 = vmax.f32 %v1621, 0.0
        %v1780 = vmax.f32 %v1626, 0.0
        %v1781 = vmax.f32 %v1631, 0.0
        %v1782 = vmax.f32 %v1636, 0.0
        %v1783 = vmax.f32 %v1641, 0.0
        %v1784 = vmax.f32 %v1646, 0.0
        %v1785 = vmax.f32 %v1651, 0.0
        %v1786 = vmax.f32 %v1656, 0.0
        %v1787 = vmax.f32 %v1661, 0.0
        %v1788 = vmax.f32 %v1666, 0.0
        %v1789 = vmax.f32 %v1671, 0.0
        %v1790 = vmax.f32 %v1676, 0.0
        %v1791 = vmax.f32 %v1681, 0.0
        %v1792 = vmax.f32 %v1686, 0.0
        %v1793 = vmax.f32 %v1691, 0.0
        %v1794 = vmax.f32 %v1696, 0.0
        %v1795 = vmax.f32 %v1701, 0.0
        %v1796 = vmax.f32 %v1706, 0.0
        %v1797 = vmax.f32 %v1711, 0.0
        %v1798 = vmax.f32 %v1716, 0.0
        %v1799 = vmax.f32 %v1721, 0.0
        %v1800 = vmax.f32 %v1726, 0.0
        %v1801 = vmax.f32 %v1731, 0.0
        %v1802 = vmax.f32 %v1736, 0.0
        %v1803 = vmax.f32 %v1741, 0.0
        %v1804 = vmax.f32 %v1746, 0.0
        %v1805 = vmax.f32 %v1751, 0.0
        %v1806 = vmax.f32 %v1756, 0.0
        %v1807 = vmax.f32 %v1761, 0.0
        %v1808 = vmax.f32 %v1766, 0.0
        %v1809 = vmax.f32 %v1771, 0.0
        %v1810 = vmax.f32 %v1776, 0.0
        %v1811 = vld [vmem:[%s8] sm:$0xff]
        %v1812 = vld [vmem:[%s8 + $0x8] sm:$0xff]
        %v1813 = vld [vmem:[%s8 + $0x10] sm:$0xff]
        %v1814 = vld [vmem:[%s8 + $0x18] sm:$0xff]
        %v1816 = vsel %vm1093, %v1779, 0
        %v1819 = vsel %vm1093, %v1780, 0
        %v1822 = vsel %vm1093, %v1781, 0
        %v1825 = vsel %vm1093, %v1782, 0
        %v1828 = vsel %vm1093, %v1783, 0
        %v1831 = vsel %vm1093, %v1784, 0
        %v1834 = vsel %vm1093, %v1785, 0
        %v1837 = vsel %vm1093, %v1786, 0
        %v1840 = vsel %vm1093, %v1787, 0
        %v1843 = vsel %vm1093, %v1788, 0
        %v1846 = vsel %vm1093, %v1789, 0
        %v1849 = vsel %vm1093, %v1790, 0
        %v1852 = vsel %vm1093, %v1791, 0
        %v1855 = vsel %vm1093, %v1792, 0
        %v1858 = vsel %vm1093, %v1793, 0
        %v1861 = vsel %vm1093, %v1794, 0
        %v1864 = vsel %vm1093, %v1795, 0
        %v1867 = vsel %vm1093, %v1796, 0
        %v1870 = vsel %vm1093, %v1797, 0
        %v1873 = vsel %vm1093, %v1798, 0
        %v1876 = vsel %vm1093, %v1799, 0
        %v1879 = vsel %vm1093, %v1800, 0
        %v1882 = vsel %vm1093, %v1801, 0
        %v1885 = vsel %vm1093, %v1802, 0
        %v1888 = vsel %vm1093, %v1803, 0
        %v1891 = vsel %vm1093, %v1804, 0
        %v1894 = vsel %vm1093, %v1805, 0
        %v1897 = vsel %vm1093, %v1806, 0
        %v1900 = vsel %vm1093, %v1807, 0
        %v1903 = vsel %vm1093, %v1808, 0
        %v1906 = vsel %vm1093, %v1809, 0
        %v1909 = vsel %vm1093, %v1810, 0
        %1911 = vmatprep.subr.mxu0 0.0
        %1912 = vmatpush1.msra.mxu0 %v1811
        %1913 = vmatprep.subr.mxu0 0.0
        %1914 = vmatpush1.msra.mxu0 %v1812
        %1915 = vmatprep.subr.mxu0 0.0
        %1916 = vmatpush1.msra.mxu0 %v1813
        %1917 = vmatprep.subr.mxu0 0.0
        %1918 = vmatpush1.msra.mxu0 %v1814
        %1919 = vmatprep.subr.mxu0 0.0
        %1920 = vmatpush1.msra.mxu0 0.0
        %1921 = vmatprep.subr.mxu0 0.0
        %1922 = vmatpush1.msra.mxu0 0.0
        %1923 = vmatprep.subr.mxu0 0.0
        %1924 = vmatpush1.msra.mxu0 0.0
        %1925 = vmatprep.subr.mxu0 0.0
        %1926 = vmatpush1.msra.mxu0 0.0
        %1927 = vmatprep.subr.mxu0 0.0
        %1928 = vmatpush1.msra.mxu0 0.0
        %1929 = vmatprep.subr.mxu0 0.0
        %1930 = vmatpush1.msra.mxu0 0.0
        %1931 = vmatprep.subr.mxu0 0.0
        %1932 = vmatpush1.msra.mxu0 0.0
        %1933 = vmatprep.subr.mxu0 0.0
        %1934 = vmatpush1.msra.mxu0 0.0
        %1935 = vmatprep.subr.mxu0 0.0
        %1936 = vmatpush1.msra.mxu0 0.0
        %1937 = vmatprep.subr.mxu0 0.0
        %1938 = vmatpush1.msra.mxu0 0.0
        %1939 = vmatprep.subr.mxu0 0.0
        %1940 = vmatpush1.msra.mxu0 0.0
        %1941 = vmatprep.subr.mxu0 0.0
        %1942 = vmatpush1.msra.mxu0 0.0
        %1943 = vmatprep.subr.mxu0 0.0
        %1944 = vmatpush1.msra.mxu0 0.0
        %1945 = vmatprep.subr.mxu0 0.0
        %1946 = vmatpush1.msra.mxu0 0.0
        %1947 = vmatprep.subr.mxu0 0.0
        %1948 = vmatpush1.msra.mxu0 0.0
        %1949 = vmatprep.subr.mxu0 0.0
        %1950 = vmatpush1.msra.mxu0 0.0
        %1951 = vmatprep.subr.mxu0 0.0
        %1952 = vmatpush1.msra.mxu0 0.0
        %1953 = vmatprep.subr.mxu0 0.0
        %1954 = vmatpush1.msra.mxu0 0.0
        %1955 = vmatprep.subr.mxu0 0.0
        %1956 = vmatpush1.msra.mxu0 0.0
        %1957 = vmatprep.subr.mxu0 0.0
        %1958 = vmatpush1.msra.mxu0 0.0
        %1959 = vmatprep.subr.mxu0 0.0
        %1960 = vmatpush1.msra.mxu0 0.0
        %1961 = vmatprep.subr.mxu0 0.0
        %1962 = vmatpush1.msra.mxu0 0.0
        %1963 = vmatprep.subr.mxu0 0.0
        %1964 = vmatpush1.msra.mxu0 0.0
        %1965 = vmatprep.subr.mxu0 0.0
        %1966 = vmatpush1.msra.mxu0 0.0
        %1967 = vmatprep.subr.mxu0 0.0
        %1968 = vmatpush1.msra.mxu0 0.0
        %1969 = vmatprep.subr.mxu0 0.0
        %1970 = vmatpush1.msra.mxu0 0.0
        %1971 = vmatprep.subr.mxu0 0.0
        %1972 = vmatpush1.msra.mxu0 0.0
        %1973 = vmatprep.subr.mxu0 0.0
        %1974 = vmatpush1.msra.mxu0 0.0
        %1975 = vmatprep.mubr.f32.mxu0 0.0
        %1976 = vmatmul.mubr.f32.gmra.mrb[0].mxu0 %v1816
        %v1977 = vpop.f32.mrb[0].mxu0
        %v1978 = vadd.f32 %v924, %v1977
        %v1979 = vpop.f32.mrb[0].mxu0
        %1980 = vmatprep.mubr.f32.mxu0 0.0
        %1981 = vmatmul.mubr.f32.gmra.mrb[0].mxu0 %v1819
        %v1982 = vpop.f32.mrb[0].mxu0
        %v1983 = vadd.f32 %v929, %v1982
        %v1984 = vpop.f32.mrb[0].mxu0
        %1985 = vmatprep.mubr.f32.mxu0 0.0
        %1986 = vmatmul.mubr.f32.gmra.mrb[0].mxu0 %v1822
        %v1987 = vpop.f32.mrb[0].mxu0
        %v1988 = vadd.f32 %v934, %v1987
        %v1989 = vpop.f32.mrb[0].mxu0
        %1990 = vmatprep.mubr.f32.mxu0 0.0
        %1991 = vmatmul.mubr.f32.gmra.mrb[0].mxu0 %v1825
        %v1992 = vpop.f32.mrb[0].mxu0
        %v1993 = vadd.f32 %v939, %v1992
        %v1994 = vpop.f32.mrb[0].mxu0
        %1995 = vmatprep.mubr.f32.mxu0 0.0
        %1996 = vmatmul.mubr.f32.gmra.mrb[0].mxu0 %v1828
        %v1997 = vpop.f32.mrb[0].mxu0
        %v1998 = vadd.f32 %v944, %v1997
        %v1999 = vpop.f32.mrb[0].mxu0
        %2000 = vmatprep.mubr.f32.mxu0 0.0
        %2001 = vmatmul.mubr.f32.gmra.mrb[0].mxu0 %v1831
        %v2002 = vpop.f32.mrb[0].mxu0
        %v2003 = vadd.f32 %v949, %v2002
        %v2004 = vpop.f32.mrb[0].mxu0
        %2005 = vmatprep.mubr.f32.mxu0 0.0
        %2006 = vmatmul.mubr.f32.gmra.mrb[0].mxu0 %v1834
        %v2007 = vpop.f32.mrb[0].mxu0
        %v2008 = vadd.f32 %v954, %v2007
        %v2009 = vpop.f32.mrb[0].mxu0
        %2010 = vmatprep.mubr.f32.mxu0 0.0
        %2011 = vmatmul.mubr.f32.gmra.mrb[0].mxu0 %v1837
        %v2012 = vpop.f32.mrb[0].mxu0
        %v2013 = vadd.f32 %v959, %v2012
        %v2014 = vpop.f32.mrb[0].mxu0
        %2015 = vmatprep.mubr.f32.mxu0 0.0
        %2016 = vmatmul.mubr.f32.gmra.mrb[0].mxu0 %v1840
        %v2017 = vpop.f32.mrb[0].mxu0
        %v2018 = vadd.f32 %v964, %v2017
        %v2019 = vpop.f32.mrb[0].mxu0
        %2020 = vmatprep.mubr.f32.mxu0 0.0
        %2021 = vmatmul.mubr.f32.gmra.mrb[0].mxu0 %v1843
        %v2022 = vpop.f32.mrb[0].mxu0
        %v2023 = vadd.f32 %v969, %v2022
        %v2024 = vpop.f32.mrb[0].mxu0
        %2025 = vmatprep.mubr.f32.mxu0 0.0
        %2026 = vmatmul.mubr.f32.gmra.mrb[0].mxu0 %v1846
        %v2027 = vpop.f32.mrb[0].mxu0
        %v2028 = vadd.f32 %v974, %v2027
        %v2029 = vpop.f32.mrb[0].mxu0
        %2030 = vmatprep.mubr.f32.mxu0 0.0
        %2031 = vmatmul.mubr.f32.gmra.mrb[0].mxu0 %v1849
        %v2032 = vpop.f32.mrb[0].mxu0
        %v2033 = vadd.f32 %v979, %v2032
        %v2034 = vpop.f32.mrb[0].mxu0
        %2035 = vmatprep.mubr.f32.mxu0 0.0
        %2036 = vmatmul.mubr.f32.gmra.mrb[0].mxu0 %v1852
        %v2037 = vpop.f32.mrb[0].mxu0
        %v2038 = vadd.f32 %v984, %v2037
        %v2039 = vpop.f32.mrb[0].mxu0
        %2040 = vmatprep.mubr.f32.mxu0 0.0
        %2041 = vmatmul.mubr.f32.gmra.mrb[0].mxu0 %v1855
        %v2042 = vpop.f32.mrb[0].mxu0
        %v2043 = vadd.f32 %v989, %v2042
        %v2044 = vpop.f32.mrb[0].mxu0
        %2045 = vmatprep.mubr.f32.mxu0 0.0
        %2046 = vmatmul.mubr.f32.gmra.mrb[0].mxu0 %v1858
        %v2047 = vpop.f32.mrb[0].mxu0
        %v2048 = vadd.f32 %v994, %v2047
        %v2049 = vpop.f32.mrb[0].mxu0
        %2050 = vmatprep.mubr.f32.mxu0 0.0
        %2051 = vmatmul.mubr.f32.gmra.mrb[0].mxu0 %v1861
        %v2052 = vpop.f32.mrb[0].mxu0
        %v2053 = vadd.f32 %v999, %v2052
        %v2054 = vpop.f32.mrb[0].mxu0
        %2055 = vmatprep.mubr.f32.mxu0 0.0
        %2056 = vmatmul.mubr.f32.gmra.mrb[0].mxu0 %v1864
        %v2057 = vpop.f32.mrb[0].mxu0
        %v2058 = vadd.f32 %v1004, %v2057
        %v2059 = vpop.f32.mrb[0].mxu0
        %2060 = vmatprep.mubr.f32.mxu0 0.0
        %2061 = vmatmul.mubr.f32.gmra.mrb[0].mxu0 %v1867
        %v2062 = vpop.f32.mrb[0].mxu0
        %v2063 = vadd.f32 %v1009, %v2062
        %v2064 = vpop.f32.mrb[0].mxu0
        %2065 = vmatprep.mubr.f32.mxu0 0.0
        %2066 = vmatmul.mubr.f32.gmra.mrb[0].mxu0 %v1870
        %v2067 = vpop.f32.mrb[0].mxu0
        %v2068 = vadd.f32 %v1014, %v2067
        %v2069 = vpop.f32.mrb[0].mxu0
        %2070 = vmatprep.mubr.f32.mxu0 0.0
        %2071 = vmatmul.mubr.f32.gmra.mrb[0].mxu0 %v1873
        %v2072 = vpop.f32.mrb[0].mxu0
        %v2073 = vadd.f32 %v1019, %v2072
        %v2074 = vpop.f32.mrb[0].mxu0
        %2075 = vmatprep.mubr.f32.mxu0 0.0
        %2076 = vmatmul.mubr.f32.gmra.mrb[0].mxu0 %v1876
        %v2077 = vpop.f32.mrb[0].mxu0
        %v2078 = vadd.f32 %v1024, %v2077
        %v2079 = vpop.f32.mrb[0].mxu0
        %2080 = vmatprep.mubr.f32.mxu0 0.0
        %2081 = vmatmul.mubr.f32.gmra.mrb[0].mxu0 %v1879
        %v2082 = vpop.f32.mrb[0].mxu0
        %v2083 = vadd.f32 %v1029, %v2082
        %v2084 = vpop.f32.mrb[0].mxu0
        %2085 = vmatprep.mubr.f32.mxu0 0.0
        %2086 = vmatmul.mubr.f32.gmra.mrb[0].mxu0 %v1882
        %v2087 = vpop.f32.mrb[0].mxu0
        %v2088 = vadd.f32 %v1034, %v2087
        %v2089 = vpop.f32.mrb[0].mxu0
        %2090 = vmatprep.mubr.f32.mxu0 0.0
        %2091 = vmatmul.mubr.f32.gmra.mrb[0].mxu0 %v1885
        %v2092 = vpop.f32.mrb[0].mxu0
        %v2093 = vadd.f32 %v1039, %v2092
        %v2094 = vpop.f32.mrb[0].mxu0
        %2095 = vmatprep.mubr.f32.mxu0 0.0
        %2096 = vmatmul.mubr.f32.gmra.mrb[0].mxu0 %v1888
        %v2097 = vpop.f32.mrb[0].mxu0
        %v2098 = vadd.f32 %v1044, %v2097
        %v2099 = vpop.f32.mrb[0].mxu0
        %2100 = vmatprep.mubr.f32.mxu0 0.0
        %2101 = vmatmul.mubr.f32.gmra.mrb[0].mxu0 %v1891
        %v2102 = vpop.f32.mrb[0].mxu0
        %v2103 = vadd.f32 %v1049, %v2102
        %v2104 = vpop.f32.mrb[0].mxu0
        %2105 = vmatprep.mubr.f32.mxu0 0.0
        %2106 = vmatmul.mubr.f32.gmra.mrb[0].mxu0 %v1894
        %v2107 = vpop.f32.mrb[0].mxu0
        %v2108 = vadd.f32 %v1054, %v2107
        %v2109 = vpop.f32.mrb[0].mxu0
        %2110 = vmatprep.mubr.f32.mxu0 0.0
        %2111 = vmatmul.mubr.f32.gmra.mrb[0].mxu0 %v1897
        %v2112 = vpop.f32.mrb[0].mxu0
        %v2113 = vadd.f32 %v1059, %v2112
        %v2114 = vpop.f32.mrb[0].mxu0
        %2115 = vmatprep.mubr.f32.mxu0 0.0
        %2116 = vmatmul.mubr.f32.gmra.mrb[0].mxu0 %v1900
        %v2117 = vpop.f32.mrb[0].mxu0
        %v2118 = vadd.f32 %v1064, %v2117
        %v2119 = vpop.f32.mrb[0].mxu0
        %2120 = vmatprep.mubr.f32.mxu0 0.0
        %2121 = vmatmul.mubr.f32.gmra.mrb[0].mxu0 %v1903
        %v2122 = vpop.f32.mrb[0].mxu0
        %v2123 = vadd.f32 %v1069, %v2122
        %v2124 = vpop.f32.mrb[0].mxu0
        %2125 = vmatprep.mubr.f32.mxu0 0.0
        %2126 = vmatmul.mubr.f32.gmra.mrb[0].mxu0 %v1906
        %v2127 = vpop.f32.mrb[0].mxu0
        %v2128 = vadd.f32 %v1074, %v2127
        %v2129 = vpop.f32.mrb[0].mxu0
        %2130 = vmatprep.mubr.f32.mxu0 0.0
        %2131 = vmatmul.mubr.f32.gmra.mrb[0].mxu0 %v1909
        %v2132 = vpop.f32.mrb[0].mxu0
        %v2133 = vadd.f32 %v1079, %v2132
        %v2134 = vpop.f32.mrb[0].mxu0
        %2135 = vdwg.mxu0
        %s2136 = sld [smem:[#allocation2]]
        %v2137 = vstv %s2136
        %v2138 = vadd.f32 %v1978, %v2137
        %v2139 = vadd.f32 %v1983, %v2137
        %v2140 = vadd.f32 %v1988, %v2137
        %v2141 = vadd.f32 %v1993, %v2137
        %v2142 = vadd.f32 %v1998, %v2137
        %v2143 = vadd.f32 %v2003, %v2137
        %v2144 = vadd.f32 %v2008, %v2137
        %v2145 = vadd.f32 %v2013, %v2137
        %v2146 = vadd.f32 %v2018, %v2137
        %v2147 = vadd.f32 %v2023, %v2137
        %v2148 = vadd.f32 %v2028, %v2137
        %v2149 = vadd.f32 %v2033, %v2137
        %v2150 = vadd.f32 %v2038, %v2137
        %v2151 = vadd.f32 %v2043, %v2137
        %v2152 = vadd.f32 %v2048, %v2137
        %v2153 = vadd.f32 %v2053, %v2137
        %v2154 = vadd.f32 %v2058, %v2137
        %v2155 = vadd.f32 %v2063, %v2137
        %v2156 = vadd.f32 %v2068, %v2137
        %v2157 = vadd.f32 %v2073, %v2137
        %v2158 = vadd.f32 %v2078, %v2137
        %v2159 = vadd.f32 %v2083, %v2137
        %v2160 = vadd.f32 %v2088, %v2137
        %v2161 = vadd.f32 %v2093, %v2137
        %v2162 = vadd.f32 %v2098, %v2137
        %v2163 = vadd.f32 %v2103, %v2137
        %v2164 = vadd.f32 %v2108, %v2137
        %v2165 = vadd.f32 %v2113, %v2137
        %v2166 = vadd.f32 %v2118, %v2137
        %v2167 = vadd.f32 %v2123, %v2137
        %v2168 = vadd.f32 %v2128, %v2137
        %v2169 = vadd.f32 %v2133, %v2137
        %v2170 = vxor.u32 %v2138, 2147483648
        %v2171 = vxor.u32 %v2139, 2147483648
        %v2172 = vxor.u32 %v2140, 2147483648
        %v2173 = vxor.u32 %v2141, 2147483648
        %v2174 = vxor.u32 %v2142, 2147483648
        %v2175 = vxor.u32 %v2143, 2147483648
        %v2176 = vxor.u32 %v2144, 2147483648
        %v2177 = vxor.u32 %v2145, 2147483648
        %v2178 = vxor.u32 %v2146, 2147483648
        %v2179 = vxor.u32 %v2147, 2147483648
        %v2180 = vxor.u32 %v2148, 2147483648
        %v2181 = vxor.u32 %v2149, 2147483648
        %v2182 = vxor.u32 %v2150, 2147483648
        %v2183 = vxor.u32 %v2151, 2147483648
        %v2184 = vxor.u32 %v2152, 2147483648
        %v2185 = vxor.u32 %v2153, 2147483648
        %v2186 = vxor.u32 %v2154, 2147483648
        %v2187 = vxor.u32 %v2155, 2147483648
        %v2188 = vxor.u32 %v2156, 2147483648
        %v2189 = vxor.u32 %v2157, 2147483648
        %v2190 = vxor.u32 %v2158, 2147483648
        %v2191 = vxor.u32 %v2159, 2147483648
        %v2192 = vxor.u32 %v2160, 2147483648
        %v2193 = vxor.u32 %v2161, 2147483648
        %v2194 = vxor.u32 %v2162, 2147483648
        %v2195 = vxor.u32 %v2163, 2147483648
        %v2196 = vxor.u32 %v2164, 2147483648
        %v2197 = vxor.u32 %v2165, 2147483648
        %v2198 = vxor.u32 %v2166, 2147483648
        %v2199 = vxor.u32 %v2167, 2147483648
        %v2200 = vxor.u32 %v2168, 2147483648
        %v2201 = vxor.u32 %v2169, 2147483648
        %v2202 = vmul.f32 %v2170, 1.442695
        %v2203 = vpow.pop %v2202
        %v2204 = vmul.f32 %v2171, 1.442695
        %v2205 = vpow.pop %v2204
        %v2206 = vmul.f32 %v2172, 1.442695
        %v2207 = vpow.pop %v2206
        %v2208 = vmul.f32 %v2173, 1.442695
        %v2209 = vpow.pop %v2208
        %v2210 = vmul.f32 %v2174, 1.442695
        %v2211 = vpow.pop %v2210
        %v2212 = vmul.f32 %v2175, 1.442695
        %v2213 = vpow.pop %v2212
        %v2214 = vmul.f32 %v2176, 1.442695
        %v2215 = vpow.pop %v2214
        %v2216 = vmul.f32 %v2177, 1.442695
        %v2217 = vpow.pop %v2216
        %v2218 = vmul.f32 %v2178, 1.442695
        %v2219 = vpow.pop %v2218
        %v2220 = vmul.f32 %v2179, 1.442695
        %v2221 = vpow.pop %v2220
        %v2222 = vmul.f32 %v2180, 1.442695
        %v2223 = vpow.pop %v2222
        %v2224 = vmul.f32 %v2181, 1.442695
        %v2225 = vpow.pop %v2224
        %v2226 = vmul.f32 %v2182, 1.442695
        %v2227 = vpow.pop %v2226
        %v2228 = vmul.f32 %v2183, 1.442695
        %v2229 = vpow.pop %v2228
        %v2230 = vmul.f32 %v2184, 1.442695
        %v2231 = vpow.pop %v2230
        %v2232 = vmul.f32 %v2185, 1.442695
        %v2233 = vpow.pop %v2232
        %v2234 = vmul.f32 %v2186, 1.442695
        %v2235 = vpow.pop %v2234
        %v2236 = vmul.f32 %v2187, 1.442695
        %v2237 = vpow.pop %v2236
        %v2238 = vmul.f32 %v2188, 1.442695
        %v2239 = vpow.pop %v2238
        %v2240 = vmul.f32 %v2189, 1.442695
        %v2241 = vpow.pop %v2240
        %v2242 = vmul.f32 %v2190, 1.442695
        %v2243 = vpow.pop %v2242
        %v2244 = vmul.f32 %v2191, 1.442695
        %v2245 = vpow.pop %v2244
        %v2246 = vmul.f32 %v2192, 1.442695
        %v2247 = vpow.pop %v2246
        %v2248 = vmul.f32 %v2193, 1.442695
        %v2249 = vpow.pop %v2248
        %v2250 = vmul.f32 %v2194, 1.442695
        %v2251 = vpow.pop %v2250
        %v2252 = vmul.f32 %v2195, 1.442695
        %v2253 = vpow.pop %v2252
        %v2254 = vmul.f32 %v2196, 1.442695
        %v2255 = vpow.pop %v2254
        %v2256 = vmul.f32 %v2197, 1.442695
        %v2257 = vpow.pop %v2256
        %v2258 = vmul.f32 %v2198, 1.442695
        %v2259 = vpow.pop %v2258
        %v2260 = vmul.f32 %v2199, 1.442695
        %v2261 = vpow.pop %v2260
        %v2262 = vmul.f32 %v2200, 1.442695
        %v2263 = vpow.pop %v2262
        %v2264 = vmul.f32 %v2201, 1.442695
        %v2265 = vpow.pop %v2264
        %v2266 = vadd.f32 %v2203, 1.0
        %v2267 = vadd.f32 %v2205, 1.0
        %v2268 = vadd.f32 %v2207, 1.0
        %v2269 = vadd.f32 %v2209, 1.0
        %v2270 = vadd.f32 %v2211, 1.0
        %v2271 = vadd.f32 %v2213, 1.0
        %v2272 = vadd.f32 %v2215, 1.0
        %v2273 = vadd.f32 %v2217, 1.0
        %v2274 = vadd.f32 %v2219, 1.0
        %v2275 = vadd.f32 %v2221, 1.0
        %v2276 = vadd.f32 %v2223, 1.0
        %v2277 = vadd.f32 %v2225, 1.0
        %v2278 = vadd.f32 %v2227, 1.0
        %v2279 = vadd.f32 %v2229, 1.0
        %v2280 = vadd.f32 %v2231, 1.0
        %v2281 = vadd.f32 %v2233, 1.0
        %v2282 = vadd.f32 %v2235, 1.0
        %v2283 = vadd.f32 %v2237, 1.0
        %v2284 = vadd.f32 %v2239, 1.0
        %v2285 = vadd.f32 %v2241, 1.0
        %v2286 = vadd.f32 %v2243, 1.0
        %v2287 = vadd.f32 %v2245, 1.0
        %v2288 = vadd.f32 %v2247, 1.0
        %v2289 = vadd.f32 %v2249, 1.0
        %v2290 = vadd.f32 %v2251, 1.0
        %v2291 = vadd.f32 %v2253, 1.0
        %v2292 = vadd.f32 %v2255, 1.0
        %v2293 = vadd.f32 %v2257, 1.0
        %v2294 = vadd.f32 %v2259, 1.0
        %v2295 = vadd.f32 %v2261, 1.0
        %v2296 = vadd.f32 %v2263, 1.0
        %v2297 = vadd.f32 %v2265, 1.0
        %v2298 = vrcp.pop %v2266
        %v2299 = vmul.f32 1.0, %v2298
        %v2300 = vrcp.pop %v2267
        %v2301 = vmul.f32 1.0, %v2300
        %v2302 = vrcp.pop %v2268
        %v2303 = vmul.f32 1.0, %v2302
        %v2304 = vrcp.pop %v2269
        %v2305 = vmul.f32 1.0, %v2304
        %v2306 = vrcp.pop %v2270
        %v2307 = vmul.f32 1.0, %v2306
        %v2308 = vrcp.pop %v2271
        %v2309 = vmul.f32 1.0, %v2308
        %v2310 = vrcp.pop %v2272
        %v2311 = vmul.f32 1.0, %v2310
        %v2312 = vrcp.pop %v2273
        %v2313 = vmul.f32 1.0, %v2312
        %v2314 = vrcp.pop %v2274
        %v2315 = vmul.f32 1.0, %v2314
        %v2316 = vrcp.pop %v2275
        %v2317 = vmul.f32 1.0, %v2316
        %v2318 = vrcp.pop %v2276
        %v2319 = vmul.f32 1.0, %v2318
        %v2320 = vrcp.pop %v2277
        %v2321 = vmul.f32 1.0, %v2320
        %v2322 = vrcp.pop %v2278
        %v2323 = vmul.f32 1.0, %v2322
        %v2324 = vrcp.pop %v2279
        %v2325 = vmul.f32 1.0, %v2324
        %v2326 = vrcp.pop %v2280
        %v2327 = vmul.f32 1.0, %v2326
        %v2328 = vrcp.pop %v2281
        %v2329 = vmul.f32 1.0, %v2328
        %v2330 = vrcp.pop %v2282
        %v2331 = vmul.f32 1.0, %v2330
        %v2332 = vrcp.pop %v2283
        %v2333 = vmul.f32 1.0, %v2332
        %v2334 = vrcp.pop %v2284
        %v2335 = vmul.f32 1.0, %v2334
        %v2336 = vrcp.pop %v2285
        %v2337 = vmul.f32 1.0, %v2336
        %v2338 = vrcp.pop %v2286
        %v2339 = vmul.f32 1.0, %v2338
        %v2340 = vrcp.pop %v2287
        %v2341 = vmul.f32 1.0, %v2340
        %v2342 = vrcp.pop %v2288
        %v2343 = vmul.f32 1.0, %v2342
        %v2344 = vrcp.pop %v2289
        %v2345 = vmul.f32 1.0, %v2344
        %v2346 = vrcp.pop %v2290
        %v2347 = vmul.f32 1.0, %v2346
        %v2348 = vrcp.pop %v2291
        %v2349 = vmul.f32 1.0, %v2348
        %v2350 = vrcp.pop %v2292
        %v2351 = vmul.f32 1.0, %v2350
        %v2352 = vrcp.pop %v2293
        %v2353 = vmul.f32 1.0, %v2352
        %v2354 = vrcp.pop %v2294
        %v2355 = vmul.f32 1.0, %v2354
        %v2356 = vrcp.pop %v2295
        %v2357 = vmul.f32 1.0, %v2356
        %v2358 = vrcp.pop %v2296
        %v2359 = vmul.f32 1.0, %v2358
        %v2360 = vrcp.pop %v2297
        %v2361 = vmul.f32 1.0, %v2360
        %vm2362 = vcmask 7168
        %2363 = vst.msk [vmem:[%s473] sm:$0xff] %vm2362, %v2299
        %2364 = vst.msk [vmem:[%s473 + $0x8] sm:$0xff] %vm2362, %v2301
        %2365 = vst.msk [vmem:[%s473 + $0x10] sm:$0xff] %vm2362, %v2303
        %2366 = vst.msk [vmem:[%s473 + $0x18] sm:$0xff] %vm2362, %v2305
        %2367 = vst.msk [vmem:[%s473 + $0x20] sm:$0xff] %vm2362, %v2307
        %2368 = vst.msk [vmem:[%s473 + $0x28] sm:$0xff] %vm2362, %v2309
        %2369 = vst.msk [vmem:[%s473 + $0x30] sm:$0xff] %vm2362, %v2311
        %2370 = vst.msk [vmem:[%s473 + $0x38] sm:$0xff] %vm2362, %v2313
        %2371 = vst.msk [vmem:[%s473 + $0x40] sm:$0xff] %vm2362, %v2315
        %2372 = vst.msk [vmem:[%s473 + $0x48] sm:$0xff] %vm2362, %v2317
        %2373 = vst.msk [vmem:[%s473 + $0x50] sm:$0xff] %vm2362, %v2319
        %2374 = vst.msk [vmem:[%s473 + $0x58] sm:$0xff] %vm2362, %v2321
        %2375 = vst.msk [vmem:[%s473 + $0x60] sm:$0xff] %vm2362, %v2323
        %2376 = vst.msk [vmem:[%s473 + $0x68] sm:$0xff] %vm2362, %v2325
        %2377 = vst.msk [vmem:[%s473 + $0x70] sm:$0xff] %vm2362, %v2327
        %2378 = vst.msk [vmem:[%s473 + $0x78] sm:$0xff] %vm2362, %v2329
        %2379 = vst.msk [vmem:[%s473 + $0x80] sm:$0xff] %vm2362, %v2331
        %2380 = vst.msk [vmem:[%s473 + $0x88] sm:$0xff] %vm2362, %v2333
        %2381 = vst.msk [vmem:[%s473 + $0x90] sm:$0xff] %vm2362, %v2335
        %2382 = vst.msk [vmem:[%s473 + $0x98] sm:$0xff] %vm2362, %v2337
        %2383 = vst.msk [vmem:[%s473 + $0xa0] sm:$0xff] %vm2362, %v2339
        %2384 = vst.msk [vmem:[%s473 + $0xa8] sm:$0xff] %vm2362, %v2341
        %2385 = vst.msk [vmem:[%s473 + $0xb0] sm:$0xff] %vm2362, %v2343
        %2386 = vst.msk [vmem:[%s473 + $0xb8] sm:$0xff] %vm2362, %v2345
        %2387 = vst.msk [vmem:[%s473 + $0xc0] sm:$0xff] %vm2362, %v2347
        %2388 = vst.msk [vmem:[%s473 + $0xc8] sm:$0xff] %vm2362, %v2349
        %2389 = vst.msk [vmem:[%s473 + $0xd0] sm:$0xff] %vm2362, %v2351
        %2390 = vst.msk [vmem:[%s473 + $0xd8] sm:$0xff] %vm2362, %v2353
        %2391 = vst.msk [vmem:[%s473 + $0xe0] sm:$0xff] %vm2362, %v2355
        %2392 = vst.msk [vmem:[%s473 + $0xe8] sm:$0xff] %vm2362, %v2357
        %2393 = vst.msk [vmem:[%s473 + $0xf0] sm:$0xff] %vm2362, %v2359
        %2394 = vst.msk [vmem:[%s473 + $0xf8] sm:$0xff] %vm2362, %v2361
        %s2395 = sand.u32 %s282, 1
        %s2396 = sand.u32 %s282, 1
        %s2397 = smul.addr %s2396, 256
        %s2398 = scalar_lea.vmem [#allocation3], %s2397
        // Predicated region
        $region65: #{tpu_custom_call.1} parent=63 // pred_check
          %p2399 = pneg %p292
        $region66: #{tpu_custom_call.1} parent=63 // pred_check_branch
          %2401 = sbr.rel (%p2399) target = $region68
        $region67: #{tpu_custom_call.1} parent=63 // pred_region
          %s2402 = smul.u32 32, %s23
          %s2403 = ssub.s32 125, %s2402
          %p2404 = scmp.lt.s32.totalorder %s2403, 32
          %s2405 = scalar_select %p2404, %s2403, 32
          %s2406 = smul.u32 128, %s2405
          %p2407 = scmp.ne.s32.totalorder 0, %s2406
          %s2408 = smul.addr %s2402, 8
          %s2409 = scalar_lea.vmem %s11, %s2408
          // Predicated region
          $region69: #{tpu_custom_call.1} parent=67 // pred_check
            %p2410 = pneg %p2407
          $region70: #{tpu_custom_call.1} parent=67 // pred_check_branch
            %2412 = sbr.rel (%p2410) target = $region72
          $region71: #{tpu_custom_call.1} parent=67 // pred_region
            // Predicated region
            $region73: #{tpu_custom_call.1} parent=71 // pred_check
              _
            $region74: #{tpu_custom_call.1} parent=71 // pred_check_branch
              %2414 = sbr.rel (0) target = $region76
            $region75: #{tpu_custom_call.1} parent=71 // pred_region
              // Predicated region
              $region95: #{tpu_custom_call.1} parent=75 // pred_check
                _
              $region96: #{tpu_custom_call.1} parent=75 // pred_check_branch
                %2525 = sbr.rel (0) target = $region98
              $region97: #{tpu_custom_call.1} parent=75 // pred_region
                %s2526 = sshrl.u32 %s2405, 5
                // While loop
                $region99: #{tpu_custom_call.1} parent=97 // loop_pre_header
                  _
                $region100: #{tpu_custom_call.1} parent=97 // loop_header
                  %s2528 = sphi 0, %s2530
                  %p2529 = scmp.ge.s32.totalorder %s2528, %s2526
                  %s2533 = sphi 0, %s2602
                  %s2534 = sphi %s2398, %s2605
                  %s2535 = sphi %s2409, %s2606
                $region101: #{tpu_custom_call.1} parent=97 // loop_header_branch
                  %2532 = sbr.rel (%p2529) target = $region105
                $region102: #{tpu_custom_call.1} parent=97 // loop_body
                  %v2536 = vld [vmem:[%s2534] sm:$0xff]
                  %2537 = vst [vmem:[%s2535] sm:$0xff] %v2536
                  %v2538 = vld [vmem:[%s2534 + $0x8] sm:$0xff]
                  %2539 = vst [vmem:[%s2535 + $0x8] sm:$0xff] %v2538
                  %v2540 = vld [vmem:[%s2534 + $0x10] sm:$0xff]
                  %2541 = vst [vmem:[%s2535 + $0x10] sm:$0xff] %v2540
                  %v2542 = vld [vmem:[%s2534 + $0x18] sm:$0xff]
                  %2543 = vst [vmem:[%s2535 + $0x18] sm:$0xff] %v2542
                  %v2544 = vld [vmem:[%s2534 + $0x20] sm:$0xff]
                  %2545 = vst [vmem:[%s2535 + $0x20] sm:$0xff] %v2544
                  %v2546 = vld [vmem:[%s2534 + $0x28] sm:$0xff]
                  %2547 = vst [vmem:[%s2535 + $0x28] sm:$0xff] %v2546
                  %v2548 = vld [vmem:[%s2534 + $0x30] sm:$0xff]
                  %2549 = vst [vmem:[%s2535 + $0x30] sm:$0xff] %v2548
                  %v2550 = vld [vmem:[%s2534 + $0x38] sm:$0xff]
                  %2551 = vst [vmem:[%s2535 + $0x38] sm:$0xff] %v2550
                  %v2552 = vld [vmem:[%s2534 + $0x40] sm:$0xff]
                  %2553 = vst [vmem:[%s2535 + $0x40] sm:$0xff] %v2552
                  %v2554 = vld [vmem:[%s2534 + $0x48] sm:$0xff]
                  %2555 = vst [vmem:[%s2535 + $0x48] sm:$0xff] %v2554
                  %v2556 = vld [vmem:[%s2534 + $0x50] sm:$0xff]
                  %2557 = vst [vmem:[%s2535 + $0x50] sm:$0xff] %v2556
                  %v2558 = vld [vmem:[%s2534 + $0x58] sm:$0xff]
                  %2559 = vst [vmem:[%s2535 + $0x58] sm:$0xff] %v2558
                  %v2560 = vld [vmem:[%s2534 + $0x60] sm:$0xff]
                  %2561 = vst [vmem:[%s2535 + $0x60] sm:$0xff] %v2560
                  %v2562 = vld [vmem:[%s2534 + $0x68] sm:$0xff]
                  %2563 = vst [vmem:[%s2535 + $0x68] sm:$0xff] %v2562
                  %v2564 = vld [vmem:[%s2534 + $0x70] sm:$0xff]
                  %2565 = vst [vmem:[%s2535 + $0x70] sm:$0xff] %v2564
                  %v2566 = vld [vmem:[%s2534 + $0x78] sm:$0xff]
                  %2567 = vst [vmem:[%s2535 + $0x78] sm:$0xff] %v2566
                  %v2568 = vld [vmem:[%s2534 + $0x80] sm:$0xff]
                  %2569 = vst [vmem:[%s2535 + $0x80] sm:$0xff] %v2568
                  %v2570 = vld [vmem:[%s2534 + $0x88] sm:$0xff]
                  %2571 = vst [vmem:[%s2535 + $0x88] sm:$0xff] %v2570
                  %v2572 = vld [vmem:[%s2534 + $0x90] sm:$0xff]
                  %2573 = vst [vmem:[%s2535 + $0x90] sm:$0xff] %v2572
                  %v2574 = vld [vmem:[%s2534 + $0x98] sm:$0xff]
                  %2575 = vst [vmem:[%s2535 + $0x98] sm:$0xff] %v2574
                  %v2576 = vld [vmem:[%s2534 + $0xa0] sm:$0xff]
                  %2577 = vst [vmem:[%s2535 + $0xa0] sm:$0xff] %v2576
                  %v2578 = vld [vmem:[%s2534 + $0xa8] sm:$0xff]
                  %2579 = vst [vmem:[%s2535 + $0xa8] sm:$0xff] %v2578
                  %v2580 = vld [vmem:[%s2534 + $0xb0] sm:$0xff]
                  %2581 = vst [vmem:[%s2535 + $0xb0] sm:$0xff] %v2580
                  %v2582 = vld [vmem:[%s2534 + $0xb8] sm:$0xff]
                  %2583 = vst [vmem:[%s2535 + $0xb8] sm:$0xff] %v2582
                  %v2584 = vld [vmem:[%s2534 + $0xc0] sm:$0xff]
                  %2585 = vst [vmem:[%s2535 + $0xc0] sm:$0xff] %v2584
                  %v2586 = vld [vmem:[%s2534 + $0xc8] sm:$0xff]
                  %2587 = vst [vmem:[%s2535 + $0xc8] sm:$0xff] %v2586
                  %v2588 = vld [vmem:[%s2534 + $0xd0] sm:$0xff]
                  %2589 = vst [vmem:[%s2535 + $0xd0] sm:$0xff] %v2588
                  %v2590 = vld [vmem:[%s2534 + $0xd8] sm:$0xff]
                  %2591 = vst [vmem:[%s2535 + $0xd8] sm:$0xff] %v2590
                  %v2592 = vld [vmem:[%s2534 + $0xe0] sm:$0xff]
                  %2593 = vst [vmem:[%s2535 + $0xe0] sm:$0xff] %v2592
                  %v2594 = vld [vmem:[%s2534 + $0xe8] sm:$0xff]
                  %2595 = vst [vmem:[%s2535 + $0xe8] sm:$0xff] %v2594
                  %v2596 = vld [vmem:[%s2534 + $0xf0] sm:$0xff]
                  %2597 = vst [vmem:[%s2535 + $0xf0] sm:$0xff] %v2596
                  %v2598 = vld [vmem:[%s2534 + $0xf8] sm:$0xff]
                  %2599 = vst [vmem:[%s2535 + $0xf8] sm:$0xff] %v2598
                  %s2600 = sadd.s32 1, %s2533
                  %p2601 = scmp.ge.s32.totalorder %s2600, %s2526
                  %s2602 = scalar_select %p2601, 0, %s2600
                  %s2603 = smul.u32 %s2602, 256
                  %s2604 = smul.u32 %s2602, 256
                  %s2605 = scalar_lea.vmem %s2398, %s2603 [#allocation3]
                  %s2606 = scalar_lea.vmem %s2409, %s2604
                $region103: #{tpu_custom_call.1} parent=97 // loop_footer
                  %s2530 = sadd.s32 %s2528, 1
                $region104: #{tpu_custom_call.1} parent=97 // loop_footer_branch
                  %2527 = sbr.rel target = $region100
                $region105: #{tpu_custom_call.1} parent=97 // loop_exit
                  _
                %s2607 = sshrl.u32 %s2405, 5
                %s2608 = sand.u32 %s2405, 31
                %s2609 = smul.u32 %s2607, 32
                %s2610 = smul.u32 8, %s2609
                %s2611 = scalar_lea.vmem %s2398, %s2610 [#allocation3]
                %s2612 = smul.u32 8, %s2609
                %s2613 = scalar_lea.vmem %s2409, %s2612
                // While loop
                $region106: #{tpu_custom_call.1} parent=97 // loop_pre_header
                  _
                $region107: #{tpu_custom_call.1} parent=97 // loop_header
                  %s2615 = sphi 0, %s2617
                  %p2616 = scmp.ge.s32.totalorder %s2615, %s2608
                  %s2620 = sphi 0, %s2627
                  %s2621 = sphi %s2611, %s2630
                  %s2622 = sphi %s2613, %s2631
                $region108: #{tpu_custom_call.1} parent=97 // loop_header_branch
                  %2619 = sbr.rel (%p2616) target = $region112
                $region109: #{tpu_custom_call.1} parent=97 // loop_body
                  %v2623 = vld [vmem:[%s2621] sm:$0xff]
                  %2624 = vst [vmem:[%s2622] sm:$0xff] %v2623
                  %s2625 = sadd.s32 1, %s2620
                  %p2626 = scmp.ge.s32.totalorder %s2625, %s2608
                  %s2627 = scalar_select %p2626, 0, %s2625
                  %s2628 = smul.u32 %s2627, 8
                  %s2629 = smul.u32 %s2627, 8
                  %s2630 = scalar_lea.vmem %s2611, %s2628 [#allocation3]
                  %s2631 = scalar_lea.vmem %s2613, %s2629
                $region110: #{tpu_custom_call.1} parent=97 // loop_footer
                  %s2617 = sadd.s32 %s2615, 1
                $region111: #{tpu_custom_call.1} parent=97 // loop_footer_branch
                  %2614 = sbr.rel target = $region107
                $region112: #{tpu_custom_call.1} parent=97 // loop_exit
                  _
              $region98: #{tpu_custom_call.1} parent=75 // pred_fallthru
                _
              // Predicated region
              $region113: #{tpu_custom_call.1} parent=75 // pred_check
                _
              $region114: #{tpu_custom_call.1} parent=75 // pred_check_branch
                %2633 = sbr.rel target = $region116
              $region115: #{tpu_custom_call.1} parent=75 // pred_region
                _
              $region116: #{tpu_custom_call.1} parent=75 // pred_fallthru
                _
            $region76: #{tpu_custom_call.1} parent=71 // pred_fallthru
              _
            // Predicated region
            $region77: #{tpu_custom_call.1} parent=71 // pred_check
              _
            $region78: #{tpu_custom_call.1} parent=71 // pred_check_branch
              %2416 = sbr.rel target = $region80
            $region79: #{tpu_custom_call.1} parent=71 // pred_region
              %s2418 = sshrl.u32 %s2405, 5
              // While loop
              $region81: #{tpu_custom_call.1} parent=79 // loop_pre_header
                _
              $region82: #{tpu_custom_call.1} parent=79 // loop_header
                %s2420 = sphi 0, %s2422
                %p2421 = scmp.ge.s32.totalorder %s2420, %s2418
                %s2425 = sphi 0, %s2494
                %s2426 = sphi %s2398, %s2497
                %s2427 = sphi %s2409, %s2498
              $region83: #{tpu_custom_call.1} parent=79 // loop_header_branch
                %2424 = sbr.rel (%p2421) target = $region87
              $region84: #{tpu_custom_call.1} parent=79 // loop_body
                %v2428 = vld [vmem:[%s2426] sm:$0xff]
                %2429 = vst [vmem:[%s2427] sm:$0xff] %v2428
                %v2430 = vld [vmem:[%s2426 + $0x8] sm:$0xff]
                %2431 = vst [vmem:[%s2427 + $0x8] sm:$0xff] %v2430
                %v2432 = vld [vmem:[%s2426 + $0x10] sm:$0xff]
                %2433 = vst [vmem:[%s2427 + $0x10] sm:$0xff] %v2432
                %v2434 = vld [vmem:[%s2426 + $0x18] sm:$0xff]
                %2435 = vst [vmem:[%s2427 + $0x18] sm:$0xff] %v2434
                %v2436 = vld [vmem:[%s2426 + $0x20] sm:$0xff]
                %2437 = vst [vmem:[%s2427 + $0x20] sm:$0xff] %v2436
                %v2438 = vld [vmem:[%s2426 + $0x28] sm:$0xff]
                %2439 = vst [vmem:[%s2427 + $0x28] sm:$0xff] %v2438
                %v2440 = vld [vmem:[%s2426 + $0x30] sm:$0xff]
                %2441 = vst [vmem:[%s2427 + $0x30] sm:$0xff] %v2440
                %v2442 = vld [vmem:[%s2426 + $0x38] sm:$0xff]
                %2443 = vst [vmem:[%s2427 + $0x38] sm:$0xff] %v2442
                %v2444 = vld [vmem:[%s2426 + $0x40] sm:$0xff]
                %2445 = vst [vmem:[%s2427 + $0x40] sm:$0xff] %v2444
                %v2446 = vld [vmem:[%s2426 + $0x48] sm:$0xff]
                %2447 = vst [vmem:[%s2427 + $0x48] sm:$0xff] %v2446
                %v2448 = vld [vmem:[%s2426 + $0x50] sm:$0xff]
                %2449 = vst [vmem:[%s2427 + $0x50] sm:$0xff] %v2448
                %v2450 = vld [vmem:[%s2426 + $0x58] sm:$0xff]
                %2451 = vst [vmem:[%s2427 + $0x58] sm:$0xff] %v2450
                %v2452 = vld [vmem:[%s2426 + $0x60] sm:$0xff]
                %2453 = vst [vmem:[%s2427 + $0x60] sm:$0xff] %v2452
                %v2454 = vld [vmem:[%s2426 + $0x68] sm:$0xff]
                %2455 = vst [vmem:[%s2427 + $0x68] sm:$0xff] %v2454
                %v2456 = vld [vmem:[%s2426 + $0x70] sm:$0xff]
                %2457 = vst [vmem:[%s2427 + $0x70] sm:$0xff] %v2456
                %v2458 = vld [vmem:[%s2426 + $0x78] sm:$0xff]
                %2459 = vst [vmem:[%s2427 + $0x78] sm:$0xff] %v2458
                %v2460 = vld [vmem:[%s2426 + $0x80] sm:$0xff]
                %2461 = vst [vmem:[%s2427 + $0x80] sm:$0xff] %v2460
                %v2462 = vld [vmem:[%s2426 + $0x88] sm:$0xff]
                %2463 = vst [vmem:[%s2427 + $0x88] sm:$0xff] %v2462
                %v2464 = vld [vmem:[%s2426 + $0x90] sm:$0xff]
                %2465 = vst [vmem:[%s2427 + $0x90] sm:$0xff] %v2464
                %v2466 = vld [vmem:[%s2426 + $0x98] sm:$0xff]
                %2467 = vst [vmem:[%s2427 + $0x98] sm:$0xff] %v2466
                %v2468 = vld [vmem:[%s2426 + $0xa0] sm:$0xff]
                %2469 = vst [vmem:[%s2427 + $0xa0] sm:$0xff] %v2468
                %v2470 = vld [vmem:[%s2426 + $0xa8] sm:$0xff]
                %2471 = vst [vmem:[%s2427 + $0xa8] sm:$0xff] %v2470
                %v2472 = vld [vmem:[%s2426 + $0xb0] sm:$0xff]
                %2473 = vst [vmem:[%s2427 + $0xb0] sm:$0xff] %v2472
                %v2474 = vld [vmem:[%s2426 + $0xb8] sm:$0xff]
                %2475 = vst [vmem:[%s2427 + $0xb8] sm:$0xff] %v2474
                %v2476 = vld [vmem:[%s2426 + $0xc0] sm:$0xff]
                %2477 = vst [vmem:[%s2427 + $0xc0] sm:$0xff] %v2476
                %v2478 = vld [vmem:[%s2426 + $0xc8] sm:$0xff]
                %2479 = vst [vmem:[%s2427 + $0xc8] sm:$0xff] %v2478
                %v2480 = vld [vmem:[%s2426 + $0xd0] sm:$0xff]
                %2481 = vst [vmem:[%s2427 + $0xd0] sm:$0xff] %v2480
                %v2482 = vld [vmem:[%s2426 + $0xd8] sm:$0xff]
                %2483 = vst [vmem:[%s2427 + $0xd8] sm:$0xff] %v2482
                %v2484 = vld [vmem:[%s2426 + $0xe0] sm:$0xff]
                %2485 = vst [vmem:[%s2427 + $0xe0] sm:$0xff] %v2484
                %v2486 = vld [vmem:[%s2426 + $0xe8] sm:$0xff]
                %2487 = vst [vmem:[%s2427 + $0xe8] sm:$0xff] %v2486
                %v2488 = vld [vmem:[%s2426 + $0xf0] sm:$0xff]
                %2489 = vst [vmem:[%s2427 + $0xf0] sm:$0xff] %v2488
                %v2490 = vld [vmem:[%s2426 + $0xf8] sm:$0xff]
                %2491 = vst [vmem:[%s2427 + $0xf8] sm:$0xff] %v2490
                %s2492 = sadd.s32 1, %s2425
                %p2493 = scmp.ge.s32.totalorder %s2492, %s2418
                %s2494 = scalar_select %p2493, 0, %s2492
                %s2495 = smul.u32 %s2494, 256
                %s2496 = smul.u32 %s2494, 256
                %s2497 = scalar_lea.vmem %s2398, %s2495 [#allocation3]
                %s2498 = scalar_lea.vmem %s2409, %s2496
              $region85: #{tpu_custom_call.1} parent=79 // loop_footer
                %s2422 = sadd.s32 %s2420, 1
              $region86: #{tpu_custom_call.1} parent=79 // loop_footer_branch
                %2419 = sbr.rel target = $region82
              $region87: #{tpu_custom_call.1} parent=79 // loop_exit
                _
              %s2499 = sshrl.u32 %s2405, 5
              %s2500 = sand.u32 %s2405, 31
              %s2501 = smul.u32 %s2499, 32
              %s2502 = smul.u32 8, %s2501
              %s2503 = scalar_lea.vmem %s2398, %s2502 [#allocation3]
              %s2504 = smul.u32 8, %s2501
              %s2505 = scalar_lea.vmem %s2409, %s2504
              // While loop
              $region88: #{tpu_custom_call.1} parent=79 // loop_pre_header
                _
              $region89: #{tpu_custom_call.1} parent=79 // loop_header
                %s2507 = sphi 0, %s2509
                %p2508 = scmp.ge.s32.totalorder %s2507, %s2500
                %s2512 = sphi 0, %s2519
                %s2513 = sphi %s2503, %s2522
                %s2514 = sphi %s2505, %s2523
              $region90: #{tpu_custom_call.1} parent=79 // loop_header_branch
                %2511 = sbr.rel (%p2508) target = $region94
              $region91: #{tpu_custom_call.1} parent=79 // loop_body
                %v2515 = vld [vmem:[%s2513] sm:$0xff]
                %2516 = vst [vmem:[%s2514] sm:$0xff] %v2515
                %s2517 = sadd.s32 1, %s2512
                %p2518 = scmp.ge.s32.totalorder %s2517, %s2500
                %s2519 = scalar_select %p2518, 0, %s2517
                %s2520 = smul.u32 %s2519, 8
                %s2521 = smul.u32 %s2519, 8
                %s2522 = scalar_lea.vmem %s2503, %s2520 [#allocation3]
                %s2523 = scalar_lea.vmem %s2505, %s2521
              $region92: #{tpu_custom_call.1} parent=79 // loop_footer
                %s2509 = sadd.s32 %s2507, 1
              $region93: #{tpu_custom_call.1} parent=79 // loop_footer_branch
                %2506 = sbr.rel target = $region89
              $region94: #{tpu_custom_call.1} parent=79 // loop_exit
                _
            $region80: #{tpu_custom_call.1} parent=71 // pred_fallthru
              _
          $region72: #{tpu_custom_call.1} parent=67 // pred_fallthru
            _
          %2634 = vnop
        $region68: #{tpu_custom_call.1} parent=63 // pred_fallthru
          _
      $region64: #{tpu_custom_call.1} parent=5 // pred_fallthru
        _
      %p2635 = scmp.le.s32.totalorder 2, %s18
      // Predicated region
      $region117: #{tpu_custom_call.1} parent=5 // pred_check
        %p2636 = pneg %p2635
      $region118: #{tpu_custom_call.1} parent=5 // pred_check_branch
        %2638 = sbr.rel (%p2636) target = $region120
      $region119: #{tpu_custom_call.1} parent=5 // pred_region
        %s2639 = ssub.s32 %s18, 2
        // Predicated region
        $region121: #{tpu_custom_call.1} parent=119 // pred_check
          %p2640 = pneg %p298
        $region122: #{tpu_custom_call.1} parent=119 // pred_check_branch
          %2642 = sbr.rel (%p2640) target = $region124
        $region123: #{tpu_custom_call.1} parent=119 // pred_region
          %s2643 = sand.u32 %s283, 1
          %s2644 = sand.u32 %s283, 1
          %s2645 = smul.addr %s2644, 256
          %s2646 = scalar_lea.vmem [#allocation3], %s2645
        $region124: #{tpu_custom_call.1} parent=119 // pred_fallthru
          _
      $region120: #{tpu_custom_call.1} parent=5 // pred_fallthru
        _
    $region6: #{tpu_custom_call.1} parent=1 // loop_footer
      %s22 = sadd.s32 1, %s18
    $region7: #{tpu_custom_call.1} parent=1 // loop_footer_branch
      %17 = sbr.rel target = $region3
    $region8: #{tpu_custom_call.1} parent=1 // loop_exit
      _

</llo_original>
